<compile_context>
chip_gen: v7x
topology: tpu7x:2x2x1
jax: 0.10.0
libtpu: 0.0.40
codegen_flags: <defaults>
</compile_context>

<pallas_src>
import functools
import math

import jax
import jax.numpy as jnp
from jax.experimental import pallas as pl
from jax.experimental.pallas import tpu as pltpu


def _self_attention_kernel(q_ref, kvt_ref, wq_ref, bq_ref, wkvt_ref, bkvt_ref,
                           addmask_ref, qmask_ref, o_ref, k_scr, v_scr,
                           *, nb_head, size_per_head, mxu_dtype, fused_relayout):
    """One grid step = (batch b, query tile t).

    q_ref       : (1, TQ, Din)      query rows of this tile
    kvt_ref     : (1, 2, Din, S)    stacked [K; V] inputs, TRANSPOSED (features x seq)
    wq_ref      : (Din, Dout)       Q weight (y = x @ Wq + bq), Dout = H*d head-packed columns
    bq_ref      : (1, Dout)
    wkvt_ref    : (2, Dout, Din)    stacked [Wk; Wv], TRANSPOSED
    bkvt_ref    : (2, Dout, 1)      stacked [bk; bv] as columns
    addmask_ref : (1, 1, S)         additive key mask, already -(1-m)*1e10 (f32)
    qmask_ref   : (1, TQ, 1)        multiplicative query mask (f32)
    o_ref       : (1, TQ, Dout)
    k_scr,v_scr : (H, d, S)         per-head K^T / V^T scratch, persists across query tiles
    """
    H, d = nb_head, size_per_head
    Dout = H * d
    f32 = jnp.float32
    scale = 1.0 / math.sqrt(d)
    sdtype = k_scr.dtype

    def mx(x):
        # Operand dtype for the MXU (e.g. bf16); accumulation and element-wise math stay f32.
        return x if mxu_dtype is None else x.astype(mxu_dtype)

    t = pl.program_id(1)

    # ---- K/V projection: ONCE per batch element, amortized over all query tiles ----
    @pl.when(t == 0)
    def _project_kv():
        kvxt = kvt_ref[0]                                        # (2, Din, S)
        # y^T = W @ x^T : one batched (g=2) NN matmul with f32 accumulation -> (2, Dout, S).
        kvpt = jnp.einsum('gdc,gcs->gds', wkvt_ref[...], kvxt,
                          preferred_element_type=f32) + bkvt_ref[...]
        # Head split along the SUBLANE (row) dim: cheap d-row slices, no masked lane extracts.
        for h in range(H):
            k_scr[h] = kvpt[0, h * d:(h + 1) * d, :].astype(sdtype)
            v_scr[h] = kvpt[1, h * d:(h + 1) * d, :].astype(sdtype)

    # ---- Q projection for this tile; 1/sqrt(d) folded in here (bias included, as in torch) ----
    qx = q_ref[0]                                                # (TQ, Din)
    qp = (jnp.dot(qx, wq_ref[...], preferred_element_type=f32) + bq_ref[...]) * scale
    TQ = qp.shape[0]

    if fused_relayout:
        # Single relayout (TQ, H*d) -> (H, TQ, d).
        qh = jnp.swapaxes(qp.reshape(TQ, H, d), 0, 1)
    else:
        # Proven-safe fallback: H lane extracts stacked on a new leading axis.
        qh = jnp.stack([qp[:, h * d:(h + 1) * d] for h in range(H)], axis=0)

    # ---- scores: one head-batched NN matmul against the transposed K scratch ----
    s = jnp.einsum('hqd,hdk->hqk', mx(qh), k_scr[...],
                   preferred_element_type=f32)                   # (H, TQ, S)
    s = s + addmask_ref[0]                                       # additive key mask (1, S)

    # ---- numerically-stable softmax over keys; divide goes to the EUP ----
    m = jnp.max(s, axis=-1, keepdims=True)
    e = jnp.exp(s - m)
    denom = jnp.sum(e, axis=-1, keepdims=True)                   # (H, TQ, 1)
    r = pl.reciprocal(denom, approx=True)
    r = r * (2.0 - denom * r)          # one Newton step on the tiny vector -> f32 accuracy
    p = e * r                                                    # (H, TQ, S)

    # ---- weighted values: one head-batched NT matmul (flash-canonical form) ----
    o = jnp.einsum('hqk,hjk->hqj', mx(p), v_scr[...],
                   preferred_element_type=f32)                   # (H, TQ, d)

    qm = qmask_ref[0]                                            # (TQ, 1)
    if fused_relayout:
        # Assemble the lane-dense (TQ, Dout) slab in registers, one qm multiply, ONE dense store.
        slab = jnp.swapaxes(o, 0, 1).reshape(TQ, Dout)
        o_ref[0] = (slab * qm).astype(o_ref.dtype)
    else:
        om = o * qm                    # single qm multiply for all heads
        for h in range(H):
            o_ref[0, :, h * d:(h + 1) * d] = om[h].astype(o_ref.dtype)


# Cached decision (per MXU dtype) of whether this Mosaic build lowers the fused relayout.
_RELAYOUT_MODE = {}


def _default_block_q(S):
    if S <= 512:
        return S
    for cand in (512, 256, 128):     # bigger query tiles -> better MXU M-fill / HBM roofline
        if S % cand == 0:
            return cand
    return S


def self_attention(q, k, v, wq, bq, wk, bk, wv, bv,
                   v_mask=None, q_mask=None, *,
                   nb_head, size_per_head, block_q=None, mxu_dtype=None,
                   vmem_limit_bytes=None, relayout="auto"):
    """Multi-head attention matching SelfAttention.forward.

    q, k, v : (B, S, Din) ; wq/wk/wv : (Din, Dout), Dout = nb_head*size_per_head (y = x @ W + b);
    v_mask / q_mask : optional (B, S) {0,1} masks.  mxu_dtype: optional matmul operand dtype
    (bf16 recommended on v5e/v6e/v7x); accumulation & softmax math stay f32.
    relayout: "auto" (probe fused path eagerly, fall back to the slice path), "fused", "slice".
    """
    B, S, Din = q.shape
    H, d = nb_head, size_per_head
    Dout = H * d
    assert wq.shape == (Din, Dout)
    out_dtype = q.dtype

    if block_q is None:
        block_q = _default_block_q(S)
    assert S % block_q == 0 and (block_q == S or block_q % 8 == 0), \
        "block_q must divide S and be a multiple of 8 (or equal S)"
    NQ = S // block_q

    if v_mask is None:
        v_mask = jnp.ones((B, S), jnp.float32)
    if q_mask is None:
        q_mask = jnp.ones((B, S), jnp.float32)

    # Hoisted out of the kernel: additive key mask and broadcast-ready query mask.
    add_mask = (-(1.0 - v_mask.astype(jnp.float32)) * 1e10).reshape(B, 1, S)
    qm = q_mask.astype(jnp.float32).reshape(B, S, 1)

    # Wrapper-side layout plumbing: K/V and their weights are presented transposed so the kernel
    # computes y^T = W @ x^T and the per-head split is a cheap sublane slice into a compact
    # (H, d, S) scratch.
    kvt = jnp.stack([k, v], axis=1).swapaxes(-1, -2)             # (B, 2, Din, S)
    wkvt = jnp.stack([wk, wv], axis=0).swapaxes(-1, -2)          # (2, Dout, Din)
    bkvt = jnp.stack([bk, bv], axis=0).reshape(2, Dout, 1)       # (2, Dout, 1)  (stays f32)
    bq2 = bq.reshape(1, Dout)                                    # (1, Dout)     (stays f32)

    if mxu_dtype is not None:
        # Full-rate bf16 MXU on all generations; halves HBM/VMEM traffic for activations/weights.
        q = q.astype(mxu_dtype)
        kvt = kvt.astype(mxu_dtype)
        wq = wq.astype(mxu_dtype)
        wkvt = wkvt.astype(mxu_dtype)
    scratch_dtype = jnp.float32 if mxu_dtype is None else mxu_dtype

    cp_kwargs = dict(dimension_semantics=("parallel", "arbitrary"))
    if vmem_limit_bytes is not None:
        cp_kwargs["vmem_limit_bytes"] = vmem_limit_bytes

    def run(fused_relayout):
        kernel = functools.partial(_self_attention_kernel, nb_head=H,
                                   size_per_head=d, mxu_dtype=mxu_dtype,
                                   fused_relayout=fused_relayout)
        return pl.pallas_call(
            kernel,
            out_shape=jax.ShapeDtypeStruct((B, S, Dout), out_dtype),
            grid=(B, NQ),
            in_specs=[
                pl.BlockSpec((1, block_q, Din), lambda b, t: (b, t, 0)),     # q tile
                pl.BlockSpec((1, 2, Din, S),    lambda b, t: (b, 0, 0, 0)),  # [k; v]^T (DMA only when b changes)
                pl.BlockSpec((Din, Dout),       lambda b, t: (0, 0)),        # Wq
                pl.BlockSpec((1, Dout),         lambda b, t: (0, 0)),        # bq
                pl.BlockSpec((2, Dout, Din),    lambda b, t: (0, 0, 0)),     # [Wk; Wv]^T
                pl.BlockSpec((2, Dout, 1),      lambda b, t: (0, 0, 0)),     # [bk; bv]
                pl.BlockSpec((1, 1, S),         lambda b, t: (b, 0, 0)),     # additive key mask
                pl.BlockSpec((1, block_q, 1),   lambda b, t: (b, t, 0)),     # multiplicative q mask
            ],
            out_specs=pl.BlockSpec((1, block_q, Dout), lambda b, t: (b, t, 0)),
            scratch_shapes=[pltpu.VMEM((H, d, S), scratch_dtype),            # K^T per head
                            pltpu.VMEM((H, d, S), scratch_dtype)],           # V^T per head
            compiler_params=pltpu.CompilerParams(**cp_kwargs),
        )(q, kvt, wq, bq2, wkvt, bkvt, add_mask, qm)

    if relayout == "fused":
        return run(True)
    if relayout == "slice":
        return run(False)

    # "auto": prefer the single-relayout / single-dense-store path; if this Mosaic build cannot
    # lower the fused reshape+transpose, fall back to the proven slice-based path.  Decision is
    # cached per MXU dtype (only meaningful for eager calls; under jit pass relayout explicitly).
    cache_key = None if mxu_dtype is None else jnp.dtype(mxu_dtype).name
    cached = _RELAYOUT_MODE.get(cache_key)
    if cached is not None:
        return run(cached)
    try:
        out = run(True)
        _RELAYOUT_MODE[cache_key] = True
        return out
    except Exception:                  # fused relayout not lowerable on this version
        _RELAYOUT_MODE[cache_key] = False
        return run(False)


def self_attention_ref(q, k, v, wq, bq, wk, bk, wv, bv, v_mask, q_mask,
                       nb_head, size_per_head):
    """Pure-JAX reference mirroring the PyTorch forward exactly."""
    B, S, _ = q.shape
    d = size_per_head
    qw = (q @ wq + bq).reshape(B, S, nb_head, d).transpose(0, 2, 1, 3)
    kw = (k @ wk + bk).reshape(B, S, nb_head, d).transpose(0, 2, 1, 3)
    vw = (v @ wv + bv).reshape(B, S, nb_head, d).transpose(0, 2, 1, 3)
    a = jnp.einsum('bhqd,bhkd->bhqk', qw, kw) / math.sqrt(d)
    a = a - (1.0 - v_mask)[:, None, None, :] * 1e10
    a = jax.nn.softmax(a, axis=-1)
    o = jnp.einsum('bhqk,bhkd->bhqd', a, vw)
    o = o.transpose(0, 2, 1, 3).reshape(B, S, nb_head * d)
    return o * q_mask[:, :, None]


if __name__ == "__main__":
    # Small shapes consistent with the module: batch=2, seq=8, input_size=32,
    # nb_head=2, size_per_head=16 -> out_dim=32.
    B, S, INPUT_SIZE = 2, 8, 32
    NB_HEAD, SIZE_PER_HEAD = 2, 16
    OUT_DIM = NB_HEAD * SIZE_PER_HEAD

    key = jax.random.PRNGKey(0)
    ks = jax.random.split(key, 10)
    bound = 1.0 / math.sqrt(INPUT_SIZE)   # same scale as torch.nn.Linear default init

    q = jax.random.normal(ks[0], (B, S, INPUT_SIZE), jnp.float32)
    k = jax.random.normal(ks[1], (B, S, INPUT_SIZE), jnp.float32)
    v = jax.random.normal(ks[2], (B, S, INPUT_SIZE), jnp.float32)

    wq = jax.random.uniform(ks[3], (INPUT_SIZE, OUT_DIM), jnp.float32, -bound, bound)
    bq = jax.random.uniform(ks[4], (OUT_DIM,), jnp.float32, -bound, bound)
    wk = jax.random.uniform(ks[5], (INPUT_SIZE, OUT_DIM), jnp.float32, -bound, bound)
    bk = jax.random.uniform(ks[6], (OUT_DIM,), jnp.float32, -bound, bound)
    wv = jax.random.uniform(ks[7], (INPUT_SIZE, OUT_DIM), jnp.float32, -bound, bound)
    bv = jax.random.uniform(ks[8], (OUT_DIM,), jnp.float32, -bound, bound)

    # Non-trivial masks: last key masked out in batch 0, last query masked out in batch 1.
    v_mask = jnp.ones((B, S), jnp.float32).at[0, -1].set(0.0)
    q_mask = jnp.ones((B, S), jnp.float32).at[1, -1].set(0.0)

    ref = self_attention_ref(q, k, v, wq, bq, wk, bk, wv, bv, v_mask, q_mask,
                             NB_HEAD, SIZE_PER_HEAD)

    # 1) f32 MXU path: dtype parity with the PyTorch module.
    out = self_attention(q, k, v, wq, bq, wk, bk, wv, bv, v_mask, q_mask,
                         nb_head=NB_HEAD, size_per_head=SIZE_PER_HEAD)
    out = jax.block_until_ready(out)
    assert out.shape == (B, S, OUT_DIM)
    assert jnp.allclose(out, ref, atol=1e-4, rtol=1e-4), \
        f"f32 max abs diff = {jnp.max(jnp.abs(out - ref))}"

    # 2) bf16-on-MXU path (recommended on v5e/v6e/v7x); softmax/mask math stays f32.
    out_bf16 = self_attention(q, k, v, wq, bq, wk, bk, wv, bv, v_mask, q_mask,
                              nb_head=NB_HEAD, size_per_head=SIZE_PER_HEAD,
                              mxu_dtype=jnp.bfloat16)
    out_bf16 = jax.block_until_ready(out_bf16)
    assert jnp.allclose(out_bf16, ref, atol=5e-2, rtol=5e-2), \
        f"bf16 max abs diff = {jnp.max(jnp.abs(out_bf16 - ref))}"

    print("KERNEL_OK")
</pallas_src>

<mosaic_0001>
module attributes {stable_mosaic.version = 11 : i64} {
  func.func @_self_attention_kernel(%arg0: i32, %arg1: i32, %arg2: memref<1x8x32xf32, #tpu.memory_space<vmem>>, %arg3: memref<1x2x32x8xf32, #tpu.memory_space<vmem>>, %arg4: memref<32x32xf32, #tpu.memory_space<vmem>>, %arg5: memref<1x32xf32, #tpu.memory_space<vmem>>, %arg6: memref<2x32x32xf32, #tpu.memory_space<vmem>>, %arg7: memref<2x32x1xf32, #tpu.memory_space<vmem>>, %arg8: memref<1x1x8xf32, #tpu.memory_space<vmem>>, %arg9: memref<1x8x1xf32, #tpu.memory_space<vmem>>, %arg10: memref<1x8x32xf32, #tpu.memory_space<vmem>>, %arg11: memref<2x16x8xf32, #tpu.memory_space<vmem>>, %arg12: memref<2x16x8xf32, #tpu.memory_space<vmem>>) attributes {dimension_semantics = [#tpu.dimension_semantics<parallel>, #tpu.dimension_semantics<arbitrary>], iteration_bounds = array<i64: 2, 1>, scalar_prefetch = 0 : i64, scratch_operands = 2 : i64, tpu.core_type = #tpu.core_type<tc>, window_params = [{transform_indices = @transform_0, window_bounds = array<i64: 1, 8, 32>}, {transform_indices = @transform_1, window_bounds = array<i64: 1, 2, 32, 8>}, {pipeline_mode = #tpu.pipeline_mode<synchronous>, transform_indices = @transform_2, window_bounds = array<i64: 32, 32>}, {pipeline_mode = #tpu.pipeline_mode<synchronous>, transform_indices = @transform_3, window_bounds = array<i64: 1, 32>}, {pipeline_mode = #tpu.pipeline_mode<synchronous>, transform_indices = @transform_4, window_bounds = array<i64: 2, 32, 32>}, {pipeline_mode = #tpu.pipeline_mode<synchronous>, transform_indices = @transform_5, window_bounds = array<i64: 2, 32, 1>}, {transform_indices = @transform_6, window_bounds = array<i64: 1, 1, 8>}, {transform_indices = @transform_7, window_bounds = array<i64: 1, 8, 1>}, {transform_indices = @transform_8, window_bounds = array<i64: 1, 8, 32>}]} {
    %c0_i32 = arith.constant 0 : i32
    %0 = arith.cmpi eq, %arg1, %c0_i32 : i32
    %1 = arith.extui %0 : i1 to i32
    %c0_i32_0 = arith.constant 0 : i32
    %2 = arith.cmpi ne, %1, %c0_i32_0 : i32
    scf.if %2 {
      %c0_28 = arith.constant 0 : index
      %c0_29 = arith.constant 0 : index
      %c0_30 = arith.constant 0 : index
      %c0_31 = arith.constant 0 : index
      %46 = vector.load %arg3[%c0_28, %c0_29, %c0_30, %c0_31] : memref<1x2x32x8xf32, #tpu.memory_space<vmem>>, vector<1x2x32x8xf32>
      %47 = vector.shape_cast %46 : vector<1x2x32x8xf32> to vector<2x32x8xf32>
      %c0_32 = arith.constant 0 : index
      %c0_33 = arith.constant 0 : index
      %c0_34 = arith.constant 0 : index
      %48 = vector.load %arg6[%c0_32, %c0_33, %c0_34] : memref<2x32x32xf32, #tpu.memory_space<vmem>>, vector<2x32x32xf32>
      "tpu.trace_start"() <{level = 10 : i32, message = "gdc,gcs->gds"}> : () -> ()
      %cst_35 = arith.constant dense<0.000000e+00> : vector<2x32x8xf32>
      %49 = tpu.matmul %48, %47, %cst_35 {dimension_numbers = #tpu.dot_dimension_numbers<[2], [1], [1], [2], [0, 0, 0, 1, 1, 2], [0], [0]>} : vector<2x32x32xf32>, vector<2x32x8xf32>, vector<2x32x8xf32> -> vector<2x32x8xf32>
      "tpu.trace_stop"() : () -> ()
      %c0_36 = arith.constant 0 : index
      %c0_37 = arith.constant 0 : index
      %c0_38 = arith.constant 0 : index
      %50 = vector.load %arg7[%c0_36, %c0_37, %c0_38] : memref<2x32x1xf32, #tpu.memory_space<vmem>>, vector<2x32x1xf32>
      %51 = vector.broadcast %50 : vector<2x32x1xf32> to vector<2x32x8xf32>
      %52 = arith.addf %49, %51 : vector<2x32x8xf32>
      %53 = vector.extract_strided_slice %52 {offsets = [0, 0, 0], sizes = [1, 16, 8], strides = [1, 1, 1]} : vector<2x32x8xf32> to vector<1x16x8xf32>
      %54 = vector.shape_cast %53 : vector<1x16x8xf32> to vector<16x8xf32>
      %c0_39 = arith.constant 0 : index
      %c0_40 = arith.constant 0 : index
      %c0_41 = arith.constant 0 : index
      %55 = vector.load %arg11[%c0_39, %c0_40, %c0_41] : memref<2x16x8xf32, #tpu.memory_space<vmem>>, vector<1x16x8xf32>
      %56 = vector.shape_cast %55 : vector<1x16x8xf32> to vector<16x8xf32>
      %57 = vector.shape_cast %54 : vector<16x8xf32> to vector<1x16x8xf32>
      tpu.vector_store %arg11[%c0_39, %c0_40, %c0_41], %57 {strides = array<i32>} : memref<2x16x8xf32, #tpu.memory_space<vmem>>, vector<1x16x8xf32>,
      %58 = vector.extract_strided_slice %52 {offsets = [1, 0, 0], sizes = [1, 16, 8], strides = [1, 1, 1]} : vector<2x32x8xf32> to vector<1x16x8xf32>
      %59 = vector.shape_cast %58 : vector<1x16x8xf32> to vector<16x8xf32>
      %c0_42 = arith.constant 0 : index
      %c0_43 = arith.constant 0 : index
      %c0_44 = arith.constant 0 : index
      %60 = vector.load %arg12[%c0_42, %c0_43, %c0_44] : memref<2x16x8xf32, #tpu.memory_space<vmem>>, vector<1x16x8xf32>
      %61 = vector.shape_cast %60 : vector<1x16x8xf32> to vector<16x8xf32>
      %62 = vector.shape_cast %59 : vector<16x8xf32> to vector<1x16x8xf32>
      tpu.vector_store %arg12[%c0_42, %c0_43, %c0_44], %62 {strides = array<i32>} : memref<2x16x8xf32, #tpu.memory_space<vmem>>, vector<1x16x8xf32>,
      %63 = vector.extract_strided_slice %52 {offsets = [0, 16, 0], sizes = [1, 16, 8], strides = [1, 1, 1]} : vector<2x32x8xf32> to vector<1x16x8xf32>
      %64 = vector.shape_cast %63 : vector<1x16x8xf32> to vector<16x8xf32>
      %c1 = arith.constant 1 : index
      %c0_45 = arith.constant 0 : index
      %c0_46 = arith.constant 0 : index
      %65 = vector.load %arg11[%c1, %c0_45, %c0_46] : memref<2x16x8xf32, #tpu.memory_space<vmem>>, vector<1x16x8xf32>
      %66 = vector.shape_cast %65 : vector<1x16x8xf32> to vector<16x8xf32>
      %67 = vector.shape_cast %64 : vector<16x8xf32> to vector<1x16x8xf32>
      tpu.vector_store %arg11[%c1, %c0_45, %c0_46], %67 {strides = array<i32>} : memref<2x16x8xf32, #tpu.memory_space<vmem>>, vector<1x16x8xf32>,
      %68 = vector.extract_strided_slice %52 {offsets = [1, 16, 0], sizes = [1, 16, 8], strides = [1, 1, 1]} : vector<2x32x8xf32> to vector<1x16x8xf32>
      %69 = vector.shape_cast %68 : vector<1x16x8xf32> to vector<16x8xf32>
      %c1_47 = arith.constant 1 : index
      %c0_48 = arith.constant 0 : index
      %c0_49 = arith.constant 0 : index
      %70 = vector.load %arg12[%c1_47, %c0_48, %c0_49] : memref<2x16x8xf32, #tpu.memory_space<vmem>>, vector<1x16x8xf32>
      %71 = vector.shape_cast %70 : vector<1x16x8xf32> to vector<16x8xf32>
      %72 = vector.shape_cast %69 : vector<16x8xf32> to vector<1x16x8xf32>
      tpu.vector_store %arg12[%c1_47, %c0_48, %c0_49], %72 {strides = array<i32>} : memref<2x16x8xf32, #tpu.memory_space<vmem>>, vector<1x16x8xf32>,
    } else {
    }
    %c0 = arith.constant 0 : index
    %c0_1 = arith.constant 0 : index
    %c0_2 = arith.constant 0 : index
    %3 = vector.load %arg2[%c0, %c0_1, %c0_2] : memref<1x8x32xf32, #tpu.memory_space<vmem>>, vector<1x8x32xf32>
    %4 = vector.shape_cast %3 : vector<1x8x32xf32> to vector<8x32xf32>
    %c0_3 = arith.constant 0 : index
    %c0_4 = arith.constant 0 : index
    %5 = vector.load %arg4[%c0_3, %c0_4] : memref<32x32xf32, #tpu.memory_space<vmem>>, vector<32x32xf32>
    %cst = arith.constant dense<0.000000e+00> : vector<8x32xf32>
    %6 = tpu.matmul %4, %5, %cst {dimension_numbers = #tpu.dot_dimension_numbers<[1], [0], [0], [1], [0, 0, 1, 1], [], []>} : vector<8x32xf32>, vector<32x32xf32>, vector<8x32xf32> -> vector<8x32xf32>
    %c0_5 = arith.constant 0 : index
    %c0_6 = arith.constant 0 : index
    %7 = vector.load %arg5[%c0_5, %c0_6] : memref<1x32xf32, #tpu.memory_space<vmem>>, vector<1x32xf32>
    %8 = vector.broadcast %7 : vector<1x32xf32> to vector<8x32xf32>
    %9 = arith.addf %6, %8 : vector<8x32xf32>
    %cst_7 = arith.constant 2.500000e-01 : f32
    %10 = vector.broadcast %cst_7 : f32 to vector<8x32xf32>
    %11 = arith.mulf %9, %10 : vector<8x32xf32>
    %12 = vector.shape_cast %11 : vector<8x32xf32> to vector<8x2x16xf32>
    %13 = tpu.transpose %12, [1, 0, 2] : vector<8x2x16xf32> -> vector<2x8x16xf32>
    %c0_8 = arith.constant 0 : index
    %c0_9 = arith.constant 0 : index
    %c0_10 = arith.constant 0 : index
    %14 = vector.load %arg11[%c0_8, %c0_9, %c0_10] : memref<2x16x8xf32, #tpu.memory_space<vmem>>, vector<2x16x8xf32>
    "tpu.trace_start"() <{level = 10 : i32, message = "hqd,hdk->hqk"}> : () -> ()
    %cst_11 = arith.constant dense<0.000000e+00> : vector<2x8x8xf32>
    %15 = tpu.matmul %13, %14, %cst_11 {dimension_numbers = #tpu.dot_dimension_numbers<[2], [1], [1], [2], [0, 0, 0, 1, 1, 2], [0], [0]>} : vector<2x8x16xf32>, vector<2x16x8xf32>, vector<2x8x8xf32> -> vector<2x8x8xf32>
    "tpu.trace_stop"() : () -> ()
    %c0_12 = arith.constant 0 : index
    %c0_13 = arith.constant 0 : index
    %c0_14 = arith.constant 0 : index
    %16 = vector.load %arg8[%c0_12, %c0_13, %c0_14] : memref<1x1x8xf32, #tpu.memory_space<vmem>>, vector<1x1x8xf32>
    %17 = vector.shape_cast %16 : vector<1x1x8xf32> to vector<1x8xf32>
    %18 = vector.shape_cast %17 : vector<1x8xf32> to vector<1x1x8xf32>
    %19 = vector.broadcast %18 : vector<1x1x8xf32> to vector<2x8x8xf32>
    %20 = arith.addf %15, %19 : vector<2x8x8xf32>
    %cst_15 = arith.constant dense<0xFF800000> : vector<2x8xf32>
    %21 = vector.multi_reduction <maximumf>, %20, %cst_15 [2] : vector<2x8x8xf32> to vector<2x8xf32>
    %22 = vector.shape_cast %21 : vector<2x8xf32> to vector<2x8x1xf32>
    %23 = vector.broadcast %22 : vector<2x8x1xf32> to vector<2x8x8xf32>
    %24 = arith.subf %20, %23 : vector<2x8x8xf32>
    %25 = math.exp %24 : vector<2x8x8xf32>
    %cst_16 = arith.constant dense<0.000000e+00> : vector<2x8xf32>
    %26 = vector.multi_reduction <add>, %25, %cst_16 [2] : vector<2x8x8xf32> to vector<2x8xf32>
    %27 = vector.shape_cast %26 : vector<2x8xf32> to vector<2x8x1xf32>
    %28 = tpu.reciprocal %27 {approx = true} : vector<2x8x1xf32> -> vector<2x8x1xf32>
    %29 = arith.mulf %27, %28 : vector<2x8x1xf32>
    %cst_17 = arith.constant 2.000000e+00 : f32
    %30 = vector.broadcast %cst_17 : f32 to vector<2x8x1xf32>
    %31 = arith.subf %30, %29 : vector<2x8x1xf32>
    %32 = arith.mulf %28, %31 : vector<2x8x1xf32>
    %33 = vector.broadcast %32 : vector<2x8x1xf32> to vector<2x8x8xf32>
    %34 = arith.mulf %25, %33 : vector<2x8x8xf32>
    %c0_18 = arith.constant 0 : index
    %c0_19 = arith.constant 0 : index
    %c0_20 = arith.constant 0 : index
    %35 = vector.load %arg12[%c0_18, %c0_19, %c0_20] : memref<2x16x8xf32, #tpu.memory_space<vmem>>, vector<2x16x8xf32>
    "tpu.trace_start"() <{level = 10 : i32, message = "hqk,hjk->hqj"}> : () -> ()
    %cst_21 = arith.constant dense<0.000000e+00> : vector<2x8x16xf32>
    %36 = tpu.matmul %34, %35, %cst_21 {dimension_numbers = #tpu.dot_dimension_numbers<[2], [2], [1], [1], [0, 0, 0, 1, 1, 1], [0], [0]>} : vector<2x8x8xf32>, vector<2x16x8xf32>, vector<2x8x16xf32> -> vector<2x8x16xf32>
    "tpu.trace_stop"() : () -> ()
    %c0_22 = arith.constant 0 : index
    %c0_23 = arith.constant 0 : index
    %c0_24 = arith.constant 0 : index
    %37 = vector.load %arg9[%c0_22, %c0_23, %c0_24] : memref<1x8x1xf32, #tpu.memory_space<vmem>>, vector<1x8x1xf32>
    %38 = vector.shape_cast %37 : vector<1x8x1xf32> to vector<8x1xf32>
    %39 = tpu.transpose %36, [1, 0, 2] : vector<2x8x16xf32> -> vector<8x2x16xf32>
    %40 = vector.shape_cast %39 : vector<8x2x16xf32> to vector<8x32xf32>
    %41 = vector.broadcast %38 : vector<8x1xf32> to vector<8x32xf32>
    %42 = arith.mulf %40, %41 : vector<8x32xf32>
    %c0_25 = arith.constant 0 : index
    %c0_26 = arith.constant 0 : index
    %c0_27 = arith.constant 0 : index
    %43 = vector.load %arg10[%c0_25, %c0_26, %c0_27] : memref<1x8x32xf32, #tpu.memory_space<vmem>>, vector<1x8x32xf32>
    %44 = vector.shape_cast %43 : vector<1x8x32xf32> to vector<8x32xf32>
    %45 = vector.shape_cast %42 : vector<8x32xf32> to vector<1x8x32xf32>
    tpu.vector_store %arg10[%c0_25, %c0_26, %c0_27], %45 {strides = array<i32>} : memref<1x8x32xf32, #tpu.memory_space<vmem>>, vector<1x8x32xf32>,
    return
  }
  func.func @transform_0(%arg0: i32, %arg1: i32) -> (i32, i32, i32) {
    %c0_i32 = arith.constant 0 : i32
    %c0_i32_0 = arith.constant 0 : i32
    return %arg0, %arg1, %c0_i32 : i32, i32, i32
  }
  func.func @transform_1(%arg0: i32, %arg1: i32) -> (i32, i32, i32, i32) {
    %c0_i32 = arith.constant 0 : i32
    %c0_i32_0 = arith.constant 0 : i32
    %c0_i32_1 = arith.constant 0 : i32
    %c0_i32_2 = arith.constant 0 : i32
    return %arg0, %c0_i32, %c0_i32_0, %c0_i32_1 : i32, i32, i32, i32
  }
  func.func @transform_2(%arg0: i32, %arg1: i32) -> (i32, i32) {
    %c0_i32 = arith.constant 0 : i32
    %c0_i32_0 = arith.constant 0 : i32
    %c0_i32_1 = arith.constant 0 : i32
    return %c0_i32, %c0_i32_0 : i32, i32
  }
  func.func @transform_3(%arg0: i32, %arg1: i32) -> (i32, i32) {
    %c0_i32 = arith.constant 0 : i32
    %c0_i32_0 = arith.constant 0 : i32
    %c0_i32_1 = arith.constant 0 : i32
    return %c0_i32, %c0_i32_0 : i32, i32
  }
  func.func @transform_4(%arg0: i32, %arg1: i32) -> (i32, i32, i32) {
    %c0_i32 = arith.constant 0 : i32
    %c0_i32_0 = arith.constant 0 : i32
    %c0_i32_1 = arith.constant 0 : i32
    %c0_i32_2 = arith.constant 0 : i32
    return %c0_i32, %c0_i32_0, %c0_i32_1 : i32, i32, i32
  }
  func.func @transform_5(%arg0: i32, %arg1: i32) -> (i32, i32, i32) {
    %c0_i32 = arith.constant 0 : i32
    %c0_i32_0 = arith.constant 0 : i32
    %c0_i32_1 = arith.constant 0 : i32
    %c0_i32_2 = arith.constant 0 : i32
    return %c0_i32, %c0_i32_0, %c0_i32_1 : i32, i32, i32
  }
  func.func @transform_6(%arg0: i32, %arg1: i32) -> (i32, i32, i32) {
    %c0_i32 = arith.constant 0 : i32
    %c0_i32_0 = arith.constant 0 : i32
    %c0_i32_1 = arith.constant 0 : i32
    return %arg0, %c0_i32, %c0_i32_0 : i32, i32, i32
  }
  func.func @transform_7(%arg0: i32, %arg1: i32) -> (i32, i32, i32) {
    %c0_i32 = arith.constant 0 : i32
    %c0_i32_0 = arith.constant 0 : i32
    return %arg0, %arg1, %c0_i32 : i32, i32, i32
  }
  func.func @transform_8(%arg0: i32, %arg1: i32) -> (i32, i32, i32) {
    %c0_i32 = arith.constant 0 : i32
    %c0_i32_0 = arith.constant 0 : i32
    return %arg0, %arg1, %c0_i32 : i32, i32, i32
  }
}

module attributes {stable_mosaic.version = 11 : i64} {
  func.func @_self_attention_kernel(%arg0: i32, %arg1: i32, %arg2: memref<1x8x32xf32, #tpu.memory_space<vmem>>, %arg3: memref<1x2x32x8xf32, #tpu.memory_space<vmem>>, %arg4: memref<32x32xf32, #tpu.memory_space<vmem>>, %arg5: memref<1x32xf32, #tpu.memory_space<vmem>>, %arg6: memref<2x32x32xf32, #tpu.memory_space<vmem>>, %arg7: memref<2x32x1xf32, #tpu.memory_space<vmem>>, %arg8: memref<1x1x8xf32, #tpu.memory_space<vmem>>, %arg9: memref<1x8x1xf32, #tpu.memory_space<vmem>>, %arg10: memref<1x8x32xf32, #tpu.memory_space<vmem>>, %arg11: memref<2x16x8xf32, #tpu.memory_space<vmem>>, %arg12: memref<2x16x8xf32, #tpu.memory_space<vmem>>) attributes {dimension_semantics = [#tpu.dimension_semantics<parallel>, #tpu.dimension_semantics<arbitrary>], iteration_bounds = array<i64: 2, 1>, scalar_prefetch = 0 : i64, scratch_operands = 2 : i64, tpu.core_type = #tpu.core_type<tc>, window_params = [{transform_indices = @transform_0, window_bounds = array<i64: 1, 8, 32>}, {transform_indices = @transform_1, window_bounds = array<i64: 1, 2, 32, 8>}, {pipeline_mode = #tpu.pipeline_mode<synchronous>, transform_indices = @transform_2, window_bounds = array<i64: 32, 32>}, {pipeline_mode = #tpu.pipeline_mode<synchronous>, transform_indices = @transform_3, window_bounds = array<i64: 1, 32>}, {pipeline_mode = #tpu.pipeline_mode<synchronous>, transform_indices = @transform_4, window_bounds = array<i64: 2, 32, 32>}, {pipeline_mode = #tpu.pipeline_mode<synchronous>, transform_indices = @transform_5, window_bounds = array<i64: 2, 32, 1>}, {transform_indices = @transform_6, window_bounds = array<i64: 1, 1, 8>}, {transform_indices = @transform_7, window_bounds = array<i64: 1, 8, 1>}, {transform_indices = @transform_8, window_bounds = array<i64: 1, 8, 32>}]} {
    %c0_i32 = arith.constant 0 : i32
    %0 = arith.cmpi eq, %arg1, %c0_i32 : i32
    %1 = arith.extui %0 : i1 to i32
    %c0_i32_0 = arith.constant 0 : i32
    %2 = arith.cmpi ne, %1, %c0_i32_0 : i32
    scf.if %2 {
      %c0_30 = arith.constant 0 : index
      %c0_31 = arith.constant 0 : index
      %c0_32 = arith.constant 0 : index
      %c0_33 = arith.constant 0 : index
      %55 = vector.load %arg3[%c0_30, %c0_31, %c0_32, %c0_33] : memref<1x2x32x8xf32, #tpu.memory_space<vmem>>, vector<1x2x32x8xf32>
      %56 = vector.shape_cast %55 : vector<1x2x32x8xf32> to vector<2x32x8xf32>
      %c0_34 = arith.constant 0 : index
      %c0_35 = arith.constant 0 : index
      %c0_36 = arith.constant 0 : index
      %57 = vector.load %arg6[%c0_34, %c0_35, %c0_36] : memref<2x32x32xf32, #tpu.memory_space<vmem>>, vector<2x32x32xf32>
      "tpu.trace_start"() <{level = 10 : i32, message = "gdc,gcs->gds"}> : () -> ()
      %cst_37 = arith.constant dense<0.000000e+00> : vector<2x32x8xf32>
      %58 = tpu.matmul %57, %56, %cst_37 {dimension_numbers = #tpu.dot_dimension_numbers<[2], [1], [1], [2], [0, 0, 0, 1, 1, 2], [0], [0]>} : vector<2x32x32xf32>, vector<2x32x8xf32>, vector<2x32x8xf32> -> vector<2x32x8xf32>
      "tpu.trace_stop"() : () -> ()
      %c0_38 = arith.constant 0 : index
      %c0_39 = arith.constant 0 : index
      %c0_40 = arith.constant 0 : index
      %59 = vector.load %arg7[%c0_38, %c0_39, %c0_40] : memref<2x32x1xf32, #tpu.memory_space<vmem>>, vector<2x32x1xf32>
      %60 = vector.broadcast %59 : vector<2x32x1xf32> to vector<2x32x8xf32>
      %61 = arith.addf %58, %60 : vector<2x32x8xf32>
      %62 = vector.extract_strided_slice %61 {offsets = [0, 0, 0], sizes = [1, 16, 8], strides = [1, 1, 1]} : vector<2x32x8xf32> to vector<1x16x8xf32>
      %63 = vector.shape_cast %62 : vector<1x16x8xf32> to vector<16x8xf32>
      %c0_41 = arith.constant 0 : index
      %c0_42 = arith.constant 0 : index
      %c0_43 = arith.constant 0 : index
      %64 = vector.load %arg11[%c0_41, %c0_42, %c0_43] : memref<2x16x8xf32, #tpu.memory_space<vmem>>, vector<1x16x8xf32>
      %65 = vector.shape_cast %64 : vector<1x16x8xf32> to vector<16x8xf32>
      %66 = vector.shape_cast %63 : vector<16x8xf32> to vector<1x16x8xf32>
      tpu.vector_store %arg11[%c0_41, %c0_42, %c0_43], %66 {strides = array<i32>} : memref<2x16x8xf32, #tpu.memory_space<vmem>>, vector<1x16x8xf32>,
      %67 = vector.extract_strided_slice %61 {offsets = [1, 0, 0], sizes = [1, 16, 8], strides = [1, 1, 1]} : vector<2x32x8xf32> to vector<1x16x8xf32>
      %68 = vector.shape_cast %67 : vector<1x16x8xf32> to vector<16x8xf32>
      %c0_44 = arith.constant 0 : index
      %c0_45 = arith.constant 0 : index
      %c0_46 = arith.constant 0 : index
      %69 = vector.load %arg12[%c0_44, %c0_45, %c0_46] : memref<2x16x8xf32, #tpu.memory_space<vmem>>, vector<1x16x8xf32>
      %70 = vector.shape_cast %69 : vector<1x16x8xf32> to vector<16x8xf32>
      %71 = vector.shape_cast %68 : vector<16x8xf32> to vector<1x16x8xf32>
      tpu.vector_store %arg12[%c0_44, %c0_45, %c0_46], %71 {strides = array<i32>} : memref<2x16x8xf32, #tpu.memory_space<vmem>>, vector<1x16x8xf32>,
      %72 = vector.extract_strided_slice %61 {offsets = [0, 16, 0], sizes = [1, 16, 8], strides = [1, 1, 1]} : vector<2x32x8xf32> to vector<1x16x8xf32>
      %73 = vector.shape_cast %72 : vector<1x16x8xf32> to vector<16x8xf32>
      %c1 = arith.constant 1 : index
      %c0_47 = arith.constant 0 : index
      %c0_48 = arith.constant 0 : index
      %74 = vector.load %arg11[%c1, %c0_47, %c0_48] : memref<2x16x8xf32, #tpu.memory_space<vmem>>, vector<1x16x8xf32>
      %75 = vector.shape_cast %74 : vector<1x16x8xf32> to vector<16x8xf32>
      %76 = vector.shape_cast %73 : vector<16x8xf32> to vector<1x16x8xf32>
      tpu.vector_store %arg11[%c1, %c0_47, %c0_48], %76 {strides = array<i32>} : memref<2x16x8xf32, #tpu.memory_space<vmem>>, vector<1x16x8xf32>,
      %77 = vector.extract_strided_slice %61 {offsets = [1, 16, 0], sizes = [1, 16, 8], strides = [1, 1, 1]} : vector<2x32x8xf32> to vector<1x16x8xf32>
      %78 = vector.shape_cast %77 : vector<1x16x8xf32> to vector<16x8xf32>
      %c1_49 = arith.constant 1 : index
      %c0_50 = arith.constant 0 : index
      %c0_51 = arith.constant 0 : index
      %79 = vector.load %arg12[%c1_49, %c0_50, %c0_51] : memref<2x16x8xf32, #tpu.memory_space<vmem>>, vector<1x16x8xf32>
      %80 = vector.shape_cast %79 : vector<1x16x8xf32> to vector<16x8xf32>
      %81 = vector.shape_cast %78 : vector<16x8xf32> to vector<1x16x8xf32>
      tpu.vector_store %arg12[%c1_49, %c0_50, %c0_51], %81 {strides = array<i32>} : memref<2x16x8xf32, #tpu.memory_space<vmem>>, vector<1x16x8xf32>,
    } else {
    }
    %c0 = arith.constant 0 : index
    %c0_1 = arith.constant 0 : index
    %c0_2 = arith.constant 0 : index
    %3 = vector.load %arg2[%c0, %c0_1, %c0_2] : memref<1x8x32xf32, #tpu.memory_space<vmem>>, vector<1x8x32xf32>
    %4 = vector.shape_cast %3 : vector<1x8x32xf32> to vector<8x32xf32>
    %c0_3 = arith.constant 0 : index
    %c0_4 = arith.constant 0 : index
    %5 = vector.load %arg4[%c0_3, %c0_4] : memref<32x32xf32, #tpu.memory_space<vmem>>, vector<32x32xf32>
    %cst = arith.constant dense<0.000000e+00> : vector<8x32xf32>
    %6 = tpu.matmul %4, %5, %cst {dimension_numbers = #tpu.dot_dimension_numbers<[1], [0], [0], [1], [0, 0, 1, 1], [], []>} : vector<8x32xf32>, vector<32x32xf32>, vector<8x32xf32> -> vector<8x32xf32>
    %c0_5 = arith.constant 0 : index
    %c0_6 = arith.constant 0 : index
    %7 = vector.load %arg5[%c0_5, %c0_6] : memref<1x32xf32, #tpu.memory_space<vmem>>, vector<1x32xf32>
    %8 = vector.broadcast %7 : vector<1x32xf32> to vector<8x32xf32>
    %9 = arith.addf %6, %8 : vector<8x32xf32>
    %cst_7 = arith.constant 2.500000e-01 : f32
    %10 = vector.broadcast %cst_7 : f32 to vector<8x32xf32>
    %11 = arith.mulf %9, %10 : vector<8x32xf32>
    %12 = vector.extract_strided_slice %11 {offsets = [0, 0], sizes = [8, 16], strides = [1, 1]} : vector<8x32xf32> to vector<8x16xf32>
    %13 = vector.extract_strided_slice %11 {offsets = [0, 16], sizes = [8, 16], strides = [1, 1]} : vector<8x32xf32> to vector<8x16xf32>
    %14 = vector.shape_cast %12 : vector<8x16xf32> to vector<1x8x16xf32>
    %15 = vector.shape_cast %13 : vector<8x16xf32> to vector<1x8x16xf32>
    %16 = tpu.concatenate %14, %15 in 0 : vector<1x8x16xf32>, vector<1x8x16xf32> -> vector<2x8x16xf32>
    %c0_8 = arith.constant 0 : index
    %c0_9 = arith.constant 0 : index
    %c0_10 = arith.constant 0 : index
    %17 = vector.load %arg11[%c0_8, %c0_9, %c0_10] : memref<2x16x8xf32, #tpu.memory_space<vmem>>, vector<2x16x8xf32>
    "tpu.trace_start"() <{level = 10 : i32, message = "hqd,hdk->hqk"}> : () -> ()
    %cst_11 = arith.constant dense<0.000000e+00> : vector<2x8x8xf32>
    %18 = tpu.matmul %16, %17, %cst_11 {dimension_numbers = #tpu.dot_dimension_numbers<[2], [1], [1], [2], [0, 0, 0, 1, 1, 2], [0], [0]>} : vector<2x8x16xf32>, vector<2x16x8xf32>, vector<2x8x8xf32> -> vector<2x8x8xf32>
    "tpu.trace_stop"() : () -> ()
    %c0_12 = arith.constant 0 : index
    %c0_13 = arith.constant 0 : index
    %c0_14 = arith.constant 0 : index
    %19 = vector.load %arg8[%c0_12, %c0_13, %c0_14] : memref<1x1x8xf32, #tpu.memory_space<vmem>>, vector<1x1x8xf32>
    %20 = vector.shape_cast %19 : vector<1x1x8xf32> to vector<1x8xf32>
    %21 = vector.shape_cast %20 : vector<1x8xf32> to vector<1x1x8xf32>
    %22 = vector.broadcast %21 : vector<1x1x8xf32> to vector<2x8x8xf32>
    %23 = arith.addf %18, %22 : vector<2x8x8xf32>
    %cst_15 = arith.constant dense<0xFF800000> : vector<2x8xf32>
    %24 = vector.multi_reduction <maximumf>, %23, %cst_15 [2] : vector<2x8x8xf32> to vector<2x8xf32>
    %25 = vector.shape_cast %24 : vector<2x8xf32> to vector<2x8x1xf32>
    %26 = vector.broadcast %25 : vector<2x8x1xf32> to vector<2x8x8xf32>
    %27 = arith.subf %23, %26 : vector<2x8x8xf32>
    %28 = math.exp %27 : vector<2x8x8xf32>
    %cst_16 = arith.constant dense<0.000000e+00> : vector<2x8xf32>
    %29 = vector.multi_reduction <add>, %28, %cst_16 [2] : vector<2x8x8xf32> to vector<2x8xf32>
    %30 = vector.shape_cast %29 : vector<2x8xf32> to vector<2x8x1xf32>
    %31 = tpu.reciprocal %30 {approx = true} : vector<2x8x1xf32> -> vector<2x8x1xf32>
    %32 = arith.mulf %30, %31 : vector<2x8x1xf32>
    %cst_17 = arith.constant 2.000000e+00 : f32
    %33 = vector.broadcast %cst_17 : f32 to vector<2x8x1xf32>
    %34 = arith.subf %33, %32 : vector<2x8x1xf32>
    %35 = arith.mulf %31, %34 : vector<2x8x1xf32>
    %36 = vector.broadcast %35 : vector<2x8x1xf32> to vector<2x8x8xf32>
    %37 = arith.mulf %28, %36 : vector<2x8x8xf32>
    %c0_18 = arith.constant 0 : index
    %c0_19 = arith.constant 0 : index
    %c0_20 = arith.constant 0 : index
    %38 = vector.load %arg12[%c0_18, %c0_19, %c0_20] : memref<2x16x8xf32, #tpu.memory_space<vmem>>, vector<2x16x8xf32>
    "tpu.trace_start"() <{level = 10 : i32, message = "hqk,hjk->hqj"}> : () -> ()
    %cst_21 = arith.constant dense<0.000000e+00> : vector<2x8x16xf32>
    %39 = tpu.matmul %37, %38, %cst_21 {dimension_numbers = #tpu.dot_dimension_numbers<[2], [2], [1], [1], [0, 0, 0, 1, 1, 1], [0], [0]>} : vector<2x8x8xf32>, vector<2x16x8xf32>, vector<2x8x16xf32> -> vector<2x8x16xf32>
    "tpu.trace_stop"() : () -> ()
    %c0_22 = arith.constant 0 : index
    %c0_23 = arith.constant 0 : index
    %c0_24 = arith.constant 0 : index
    %40 = vector.load %arg9[%c0_22, %c0_23, %c0_24] : memref<1x8x1xf32, #tpu.memory_space<vmem>>, vector<1x8x1xf32>
    %41 = vector.shape_cast %40 : vector<1x8x1xf32> to vector<8x1xf32>
    %42 = vector.shape_cast %41 : vector<8x1xf32> to vector<1x8x1xf32>
    %43 = vector.broadcast %42 : vector<1x8x1xf32> to vector<2x8x16xf32>
    %44 = arith.mulf %39, %43 : vector<2x8x16xf32>
    %45 = vector.extract_strided_slice %44 {offsets = [0, 0, 0], sizes = [1, 8, 16], strides = [1, 1, 1]} : vector<2x8x16xf32> to vector<1x8x16xf32>
    %46 = vector.shape_cast %45 : vector<1x8x16xf32> to vector<8x16xf32>
    %c0_25 = arith.constant 0 : index
    %c0_26 = arith.constant 0 : index
    %c0_27 = arith.constant 0 : index
    %47 = vector.load %arg10[%c0_25, %c0_26, %c0_27] : memref<1x8x32xf32, #tpu.memory_space<vmem>>, vector<1x8x16xf32>
    %48 = vector.shape_cast %47 : vector<1x8x16xf32> to vector<8x16xf32>
    %49 = vector.shape_cast %46 : vector<8x16xf32> to vector<1x8x16xf32>
    tpu.vector_store %arg10[%c0_25, %c0_26, %c0_27], %49 {strides = array<i32>} : memref<1x8x32xf32, #tpu.memory_space<vmem>>, vector<1x8x16xf32>,
    %50 = vector.extract_strided_slice %44 {offsets = [1, 0, 0], sizes = [1, 8, 16], strides = [1, 1, 1]} : vector<2x8x16xf32> to vector<1x8x16xf32>
    %51 = vector.shape_cast %50 : vector<1x8x16xf32> to vector<8x16xf32>
    %c0_28 = arith.constant 0 : index
    %c0_29 = arith.constant 0 : index
    %c16 = arith.constant 16 : index
    %52 = vector.load %arg10[%c0_28, %c0_29, %c16] : memref<1x8x32xf32, #tpu.memory_space<vmem>>, vector<1x8x16xf32>
    %53 = vector.shape_cast %52 : vector<1x8x16xf32> to vector<8x16xf32>
    %54 = vector.shape_cast %51 : vector<8x16xf32> to vector<1x8x16xf32>
    tpu.vector_store %arg10[%c0_28, %c0_29, %c16], %54 {strides = array<i32>} : memref<1x8x32xf32, #tpu.memory_space<vmem>>, vector<1x8x16xf32>,
    return
  }
  func.func @transform_0(%arg0: i32, %arg1: i32) -> (i32, i32, i32) {
    %c0_i32 = arith.constant 0 : i32
    %c0_i32_0 = arith.constant 0 : i32
    return %arg0, %arg1, %c0_i32 : i32, i32, i32
  }
  func.func @transform_1(%arg0: i32, %arg1: i32) -> (i32, i32, i32, i32) {
    %c0_i32 = arith.constant 0 : i32
    %c0_i32_0 = arith.constant 0 : i32
    %c0_i32_1 = arith.constant 0 : i32
    %c0_i32_2 = arith.constant 0 : i32
    return %arg0, %c0_i32, %c0_i32_0, %c0_i32_1 : i32, i32, i32, i32
  }
  func.func @transform_2(%arg0: i32, %arg1: i32) -> (i32, i32) {
    %c0_i32 = arith.constant 0 : i32
    %c0_i32_0 = arith.constant 0 : i32
    %c0_i32_1 = arith.constant 0 : i32
    return %c0_i32, %c0_i32_0 : i32, i32
  }
  func.func @transform_3(%arg0: i32, %arg1: i32) -> (i32, i32) {
    %c0_i32 = arith.constant 0 : i32
    %c0_i32_0 = arith.constant 0 : i32
    %c0_i32_1 = arith.constant 0 : i32
    return %c0_i32, %c0_i32_0 : i32, i32
  }
  func.func @transform_4(%arg0: i32, %arg1: i32) -> (i32, i32, i32) {
    %c0_i32 = arith.constant 0 : i32
    %c0_i32_0 = arith.constant 0 : i32
    %c0_i32_1 = arith.constant 0 : i32
    %c0_i32_2 = arith.constant 0 : i32
    return %c0_i32, %c0_i32_0, %c0_i32_1 : i32, i32, i32
  }
  func.func @transform_5(%arg0: i32, %arg1: i32) -> (i32, i32, i32) {
    %c0_i32 = arith.constant 0 : i32
    %c0_i32_0 = arith.constant 0 : i32
    %c0_i32_1 = arith.constant 0 : i32
    %c0_i32_2 = arith.constant 0 : i32
    return %c0_i32, %c0_i32_0, %c0_i32_1 : i32, i32, i32
  }
  func.func @transform_6(%arg0: i32, %arg1: i32) -> (i32, i32, i32) {
    %c0_i32 = arith.constant 0 : i32
    %c0_i32_0 = arith.constant 0 : i32
    %c0_i32_1 = arith.constant 0 : i32
    return %arg0, %c0_i32, %c0_i32_0 : i32, i32, i32
  }
  func.func @transform_7(%arg0: i32, %arg1: i32) -> (i32, i32, i32) {
    %c0_i32 = arith.constant 0 : i32
    %c0_i32_0 = arith.constant 0 : i32
    return %arg0, %arg1, %c0_i32 : i32, i32, i32
  }
  func.func @transform_8(%arg0: i32, %arg1: i32) -> (i32, i32, i32) {
    %c0_i32 = arith.constant 0 : i32
    %c0_i32_0 = arith.constant 0 : i32
    return %arg0, %arg1, %c0_i32 : i32, i32, i32
  }
}

</mosaic_0001>

<llo_original>
// kernel: tpu_custom_call.1
$region0: #{tpu_custom_call.1}
  #allocation0 [shape = 'u32[]', space=smem, size = 0x4, offset = 0x4, fixed_abs, tag = 'smem constant byte address 0x4 - core index']
  #allocation1 [shape = 'u32[144,128]{1,0:T(1,128)}', space=vmem, size = 0x12000, scoped, tag = 'internal scratch']
  #allocation2 [shape = 'f32[2,16,8]{2,1,0:T(8,128)}', space=vmem, size = 0x4000, scoped, tag = 'scratch operand']
  #allocation3 [shape = 'f32[2,16,8]{2,1,0:T(8,128)}', space=vmem, size = 0x4000, scoped, tag = 'scratch operand']
  %s0 = inlined_call_operand.vmem [shape: f32[2,8,32], index: 0, kind: input, shape index: {}]
  %s1 = inlined_call_operand.vmem [shape: f32[2,2,32,8], index: 1, kind: input, shape index: {}]
  %s2 = inlined_call_operand.vmem [shape: f32[32,32], index: 2, kind: input, shape index: {}]
  %s3 = inlined_call_operand.vmem [shape: f32[1,32], index: 3, kind: input, shape index: {}]
  %s4 = inlined_call_operand.vmem [shape: f32[2,32,32], index: 4, kind: input, shape index: {}]
  %s5 = inlined_call_operand.vmem [shape: f32[2,32,1], index: 5, kind: input, shape index: {}]
  %s6 = inlined_call_operand.vmem [shape: f32[2,1,8], index: 6, kind: input, shape index: {}]
  %s7 = inlined_call_operand.vmem [shape: f32[2,8,1], index: 7, kind: input, shape index: {}]
  %s8 = inlined_call_operand.hbm [shape: f32[2,8,32], index: 8, kind: output, shape index: {}]
  %s9 = sld [smem:[#allocation0]]
  $region69: #{tpu_custom_call.1} parent=0
    _
  %s11 = ssub.s32 1, %s9
  %s12 = scalar_select 0, %s11, %s9
  $region1: #{tpu_custom_call.1} parent=0
    #allocation4 [shape = 'u8[8192]{0}', space=vmem, size = 0x2000, scoped, tag = 'output window, operand 0']
    #allocation5 [shape = 's32[2]{0}', space=sflag, size = 0x8, scoped, tag = 'scoped memory for tpu_custom_call.1']
    %13 = vsyncpa [#allocation5], 0
    %s14 = scalar_lea.sflag [#allocation5], 1
    %15 = vsyncpa %s14, 0
    loop: start=0, step=1, limit=4
    $region2: #{tpu_custom_call.1} parent=1 // loop_pre_header
      _
    $region3: #{tpu_custom_call.1} parent=1 // loop_header
      %s17 = sphi 0, %s21
      %p18 = scmp.ge.s32.totalorder %s17, 4
      %s24 = sphi 0, %s36
      %s25 = sphi 0, %s32
      %s26 = sphi 0, %s24
      %s27 = sphi 0, %s25
      %s28 = sphi 0, %s26
      %s29 = sphi 0, %s27
      %s41 = sphi 0, %s43
      %s44 = sphi 0, %s41
      %s45 = sphi 0, %s44
      %s61 = sphi 0, %s45
      %s67 = sphi 0, %s69
      %s70 = sphi 0, %s67
      %s71 = sphi 0, %s70
      %s87 = sphi 0, %s71
      %s91 = sphi 0, %s91
      %s93 = sphi 0, %s91
      %s94 = sphi 0, %s93
      %s108 = sphi 0, %s94
      %s112 = sphi 0, %s112
      %s114 = sphi 0, %s112
      %s115 = sphi 0, %s114
      %s129 = sphi 0, %s115
      %s133 = sphi 0, %s133
      %s135 = sphi 0, %s133
      %s136 = sphi 0, %s135
      %s150 = sphi 0, %s136
      %s154 = sphi 0, %s154
      %s156 = sphi 0, %s154
      %s157 = sphi 0, %s156
      %s171 = sphi 0, %s157
      %s177 = sphi 0, %s179
      %s180 = sphi 0, %s177
      %s181 = sphi 0, %s180
      %s197 = sphi 0, %s181
      %s205 = sphi 0, %s207
      %s208 = sphi 0, %s205
      %s209 = sphi 0, %s208
      %s225 = sphi 0, %s209
      %s233 = sphi 0, %s235
      %s236 = sphi 0, %s233
      %s237 = sphi 0, %s236
      %s253 = sphi 0, %s237
    $region4: #{tpu_custom_call.1} parent=1 // loop_header_branch
      %20 = sbr.rel (%p18) target = $region8
    $region5: #{tpu_custom_call.1} parent=1 // loop_body
      %s22 = ssub.s32 %s17, 1
      %s23 = ssub.s32 %s17, 2
      %s30 = sadd.s32 1, %s25
      %p31 = scmp.ge.s32.totalorder %s30, 1
      %s32 = scalar_select %p31, 0, %s30
      %s33 = sadd.s32 1, %s24
      %s34 = scalar_select %p31, %s33, %s24
      %p35 = scmp.ge.s32.totalorder %s34, 2
      %s36 = scalar_select %p35, 0, %s34
      %s37 = ssub.s32 %s24, %s36
      %s38 = ssub.s32 %s25, %s32
      %s39 = sor.u32 %s37, %s38
      %p40 = scmp.eq.s32.totalorder %s39, 0
      %s42 = sadd.s32 %s41, 1
      %s43 = scalar_select %p40, %s41, %s42
      %p46 = pneg %p40
      %p47 = scmp.eq.s32.totalorder %s17, 1
      %p48 = por %p46, %p47
      %p49 = scmp.ne.s32.totalorder %s41, %s44
      %p50 = scmp.eq.s32.totalorder %s17, 0
      %p51 = por %p49, %p50
      %p52 = scmp.ne.s32.totalorder %s41, %s44
      %p53 = scmp.eq.s32.totalorder %s22, 1
      %p54 = por %p52, %p53
      %p55 = scmp.ne.s32.totalorder %s44, %s45
      %p56 = scmp.eq.s32.totalorder %s22, 0
      %p57 = por %p55, %p56
      %p58 = scmp.ne.s32.totalorder %s44, %s45
      %p59 = scmp.eq.s32.totalorder %s23, 1
      %p60 = por %p58, %p59
      %p62 = scmp.ne.s32.totalorder %s45, %s61
      %p63 = scmp.eq.s32.totalorder %s23, 0
      %p64 = por %p62, %p63
      %s65 = ssub.s32 %s24, %s36
      %p66 = scmp.eq.s32.totalorder %s65, 0
      %s68 = sadd.s32 %s67, 1
      %s69 = scalar_select %p66, %s67, %s68
      %p72 = pneg %p66
      %p73 = scmp.eq.s32.totalorder %s17, 1
      %p74 = por %p72, %p73
      %p75 = scmp.ne.s32.totalorder %s67, %s70
      %p76 = scmp.eq.s32.totalorder %s17, 0
      %p77 = por %p75, %p76
      %p78 = scmp.ne.s32.totalorder %s67, %s70
      %p79 = scmp.eq.s32.totalorder %s22, 1
      %p80 = por %p78, %p79
      %p81 = scmp.ne.s32.totalorder %s70, %s71
      %p82 = scmp.eq.s32.totalorder %s22, 0
      %p83 = por %p81, %p82
      %p84 = scmp.ne.s32.totalorder %s70, %s71
      %p85 = scmp.eq.s32.totalorder %s23, 1
      %p86 = por %p84, %p85
      %p88 = scmp.ne.s32.totalorder %s71, %s87
      %p89 = scmp.eq.s32.totalorder %s23, 0
      %p90 = por %p88, %p89
      %s92 = sadd.s32 %s91, 1
      %p95 = scmp.eq.s32.totalorder %s17, 1
      %p96 = scmp.ne.s32.totalorder %s91, %s93
      %p97 = scmp.eq.s32.totalorder %s17, 0
      %p98 = por %p96, %p97
      %p99 = scmp.ne.s32.totalorder %s91, %s93
      %p100 = scmp.eq.s32.totalorder %s22, 1
      %p101 = por %p99, %p100
      %p102 = scmp.ne.s32.totalorder %s93, %s94
      %p103 = scmp.eq.s32.totalorder %s22, 0
      %p104 = por %p102, %p103
      %p105 = scmp.ne.s32.totalorder %s93, %s94
      %p106 = scmp.eq.s32.totalorder %s23, 1
      %p107 = por %p105, %p106
      %p109 = scmp.ne.s32.totalorder %s94, %s108
      %p110 = scmp.eq.s32.totalorder %s23, 0
      %p111 = por %p109, %p110
      %s113 = sadd.s32 %s112, 1
      %p116 = scmp.eq.s32.totalorder %s17, 1
      %p117 = scmp.ne.s32.totalorder %s112, %s114
      %p118 = scmp.eq.s32.totalorder %s17, 0
      %p119 = por %p117, %p118
      %p120 = scmp.ne.s32.totalorder %s112, %s114
      %p121 = scmp.eq.s32.totalorder %s22, 1
      %p122 = por %p120, %p121
      %p123 = scmp.ne.s32.totalorder %s114, %s115
      %p124 = scmp.eq.s32.totalorder %s22, 0
      %p125 = por %p123, %p124
      %p126 = scmp.ne.s32.totalorder %s114, %s115
      %p127 = scmp.eq.s32.totalorder %s23, 1
      %p128 = por %p126, %p127
      %p130 = scmp.ne.s32.totalorder %s115, %s129
      %p131 = scmp.eq.s32.totalorder %s23, 0
      %p132 = por %p130, %p131
      %s134 = sadd.s32 %s133, 1
      %p137 = scmp.eq.s32.totalorder %s17, 1
      %p138 = scmp.ne.s32.totalorder %s133, %s135
      %p139 = scmp.eq.s32.totalorder %s17, 0
      %p140 = por %p138, %p139
      %p141 = scmp.ne.s32.totalorder %s133, %s135
      %p142 = scmp.eq.s32.totalorder %s22, 1
      %p143 = por %p141, %p142
      %p144 = scmp.ne.s32.totalorder %s135, %s136
      %p145 = scmp.eq.s32.totalorder %s22, 0
      %p146 = por %p144, %p145
      %p147 = scmp.ne.s32.totalorder %s135, %s136
      %p148 = scmp.eq.s32.totalorder %s23, 1
      %p149 = por %p147, %p148
      %p151 = scmp.ne.s32.totalorder %s136, %s150
      %p152 = scmp.eq.s32.totalorder %s23, 0
      %p153 = por %p151, %p152
      %s155 = sadd.s32 %s154, 1
      %p158 = scmp.eq.s32.totalorder %s17, 1
      %p159 = scmp.ne.s32.totalorder %s154, %s156
      %p160 = scmp.eq.s32.totalorder %s17, 0
      %p161 = por %p159, %p160
      %p162 = scmp.ne.s32.totalorder %s154, %s156
      %p163 = scmp.eq.s32.totalorder %s22, 1
      %p164 = por %p162, %p163
      %p165 = scmp.ne.s32.totalorder %s156, %s157
      %p166 = scmp.eq.s32.totalorder %s22, 0
      %p167 = por %p165, %p166
      %p168 = scmp.ne.s32.totalorder %s156, %s157
      %p169 = scmp.eq.s32.totalorder %s23, 1
      %p170 = por %p168, %p169
      %p172 = scmp.ne.s32.totalorder %s157, %s171
      %p173 = scmp.eq.s32.totalorder %s23, 0
      %p174 = por %p172, %p173
      %s175 = ssub.s32 %s24, %s36
      %p176 = scmp.eq.s32.totalorder %s175, 0
      %s178 = sadd.s32 %s177, 1
      %s179 = scalar_select %p176, %s177, %s178
      %p182 = pneg %p176
      %p183 = scmp.eq.s32.totalorder %s17, 1
      %p184 = por %p182, %p183
      %p185 = scmp.ne.s32.totalorder %s177, %s180
      %p186 = scmp.eq.s32.totalorder %s17, 0
      %p187 = por %p185, %p186
      %p188 = scmp.ne.s32.totalorder %s177, %s180
      %p189 = scmp.eq.s32.totalorder %s22, 1
      %p190 = por %p188, %p189
      %p191 = scmp.ne.s32.totalorder %s180, %s181
      %p192 = scmp.eq.s32.totalorder %s22, 0
      %p193 = por %p191, %p192
      %p194 = scmp.ne.s32.totalorder %s180, %s181
      %p195 = scmp.eq.s32.totalorder %s23, 1
      %p196 = por %p194, %p195
      %p198 = scmp.ne.s32.totalorder %s181, %s197
      %p199 = scmp.eq.s32.totalorder %s23, 0
      %p200 = por %p198, %p199
      %s201 = ssub.s32 %s24, %s36
      %s202 = ssub.s32 %s25, %s32
      %s203 = sor.u32 %s201, %s202
      %p204 = scmp.eq.s32.totalorder %s203, 0
      %s206 = sadd.s32 %s205, 1
      %s207 = scalar_select %p204, %s205, %s206
      %p210 = pneg %p204
      %p211 = scmp.eq.s32.totalorder %s17, 1
      %p212 = por %p210, %p211
      %p213 = scmp.ne.s32.totalorder %s205, %s208
      %p214 = scmp.eq.s32.totalorder %s17, 0
      %p215 = por %p213, %p214
      %p216 = scmp.ne.s32.totalorder %s205, %s208
      %p217 = scmp.eq.s32.totalorder %s22, 1
      %p218 = por %p216, %p217
      %p219 = scmp.ne.s32.totalorder %s208, %s209
      %p220 = scmp.eq.s32.totalorder %s22, 0
      %p221 = por %p219, %p220
      %p222 = scmp.ne.s32.totalorder %s208, %s209
      %p223 = scmp.eq.s32.totalorder %s23, 1
      %p224 = por %p222, %p223
      %p226 = scmp.ne.s32.totalorder %s209, %s225
      %p227 = scmp.eq.s32.totalorder %s23, 0
      %p228 = por %p226, %p227
      %s229 = ssub.s32 %s24, %s36
      %s230 = ssub.s32 %s25, %s32
      %s231 = sor.u32 %s229, %s230
      %p232 = scmp.eq.s32.totalorder %s231, 0
      %s234 = sadd.s32 %s233, 1
      %s235 = scalar_select %p232, %s233, %s234
      %p238 = pneg %p232
      %p239 = scmp.eq.s32.totalorder %s17, 1
      %p240 = por %p238, %p239
      %p241 = scmp.ne.s32.totalorder %s233, %s236
      %p242 = scmp.eq.s32.totalorder %s17, 0
      %p243 = por %p241, %p242
      %p244 = scmp.ne.s32.totalorder %s233, %s236
      %p245 = scmp.eq.s32.totalorder %s22, 1
      %p246 = por %p244, %p245
      %p247 = scmp.ne.s32.totalorder %s236, %s237
      %p248 = scmp.eq.s32.totalorder %s22, 0
      %p249 = por %p247, %p248
      %p250 = scmp.ne.s32.totalorder %s236, %s237
      %p251 = scmp.eq.s32.totalorder %s23, 1
      %p252 = por %p250, %p251
      %p254 = scmp.ne.s32.totalorder %s237, %s253
      %p255 = scmp.eq.s32.totalorder %s23, 0
      %p256 = por %p254, %p255
      %p257 = scmp.le.s32.totalorder 1, %s17
      %p258 = scmp.lt.s32.totalorder %s17, 3
      %p259 = pnand %p257, %p258
      %p260 = pneg %p259
      // Predicated region
      $region9: #{tpu_custom_call.1} parent=5 // pred_check
        _
      $region10: #{tpu_custom_call.1} parent=5 // pred_check_branch
        %262 = sbr.rel (%p259) target = $region12
      $region11: #{tpu_custom_call.1} parent=5 // pred_region
        %s263 = ssub.s32 %s17, 1
        // Predicated region
        $region13: #{tpu_custom_call.1} parent=11 // pred_check
          %p264 = pneg %p104
        $region14: #{tpu_custom_call.1} parent=11 // pred_check_branch
          %266 = sbr.rel (%p264) target = $region16
        $region15: #{tpu_custom_call.1} parent=11 // pred_region
          _
        $region16: #{tpu_custom_call.1} parent=11 // pred_fallthru
          _
        // Predicated region
        $region17: #{tpu_custom_call.1} parent=11 // pred_check
          %p267 = pneg %p125
        $region18: #{tpu_custom_call.1} parent=11 // pred_check_branch
          %269 = sbr.rel (%p267) target = $region20
        $region19: #{tpu_custom_call.1} parent=11 // pred_region
          _
        $region20: #{tpu_custom_call.1} parent=11 // pred_fallthru
          _
        // Predicated region
        $region21: #{tpu_custom_call.1} parent=11 // pred_check
          %p270 = pneg %p146
        $region22: #{tpu_custom_call.1} parent=11 // pred_check_branch
          %272 = sbr.rel (%p270) target = $region24
        $region23: #{tpu_custom_call.1} parent=11 // pred_region
          _
        $region24: #{tpu_custom_call.1} parent=11 // pred_fallthru
          _
        // Predicated region
        $region25: #{tpu_custom_call.1} parent=11 // pred_check
          %p273 = pneg %p167
        $region26: #{tpu_custom_call.1} parent=11 // pred_check_branch
          %275 = sbr.rel (%p273) target = $region28
        $region27: #{tpu_custom_call.1} parent=11 // pred_region
          _
        $region28: #{tpu_custom_call.1} parent=11 // pred_fallthru
          _
      $region12: #{tpu_custom_call.1} parent=5 // pred_fallthru
        _
      %p276 = scmp.lt.s32.totalorder %s17, 2
      // Predicated region
      $region29: #{tpu_custom_call.1} parent=5 // pred_check
        %p277 = pneg %p276
      $region30: #{tpu_custom_call.1} parent=5 // pred_check_branch
        %279 = sbr.rel (%p277) target = $region32
      $region31: #{tpu_custom_call.1} parent=5 // pred_region
        // Predicated region
        $region33: #{tpu_custom_call.1} parent=31 // pred_check
          %p280 = pneg %p51
        $region34: #{tpu_custom_call.1} parent=31 // pred_check_branch
          %282 = sbr.rel (%p280) target = $region36
        $region35: #{tpu_custom_call.1} parent=31 // pred_region
          %p283 = scmp.lt.s32.totalorder %s24, 1
          %s284 = scalar_select %p283, %s24, 1
          %p285 = scmp.lt.s32.totalorder %s25, 0
          %s286 = scalar_select %p285, %s25, 0
          %s287 = sadd.s32 %s286, %s284
          %s288 = smul.addr %s287, 8
          %s289 = scalar_lea.vmem %s0, %s288
        $region36: #{tpu_custom_call.1} parent=31 // pred_fallthru
          _
        // Predicated region
        $region37: #{tpu_custom_call.1} parent=31 // pred_check
          %p290 = pneg %p77
        $region38: #{tpu_custom_call.1} parent=31 // pred_check_branch
          %292 = sbr.rel (%p290) target = $region40
        $region39: #{tpu_custom_call.1} parent=31 // pred_region
          %p293 = scmp.lt.s32.totalorder %s24, 1
          %s294 = scalar_select %p293, %s24, 1
          %s295 = smul.addr %s294, 8
          %s296 = smul.addr %s295, 8
          %s297 = scalar_lea.vmem %s1, %s296
        $region40: #{tpu_custom_call.1} parent=31 // pred_fallthru
          _
        // Predicated region
        $region41: #{tpu_custom_call.1} parent=31 // pred_check
          %p298 = pneg %p187
        $region42: #{tpu_custom_call.1} parent=31 // pred_check_branch
          %300 = sbr.rel (%p298) target = $region44
        $region43: #{tpu_custom_call.1} parent=31 // pred_region
          %p301 = scmp.lt.s32.totalorder %s24, 1
          %s302 = scalar_select %p301, %s24, 1
          %s303 = scalar_lea.vmem %s6, %s302
        $region44: #{tpu_custom_call.1} parent=31 // pred_fallthru
          _
        // Predicated region
        $region45: #{tpu_custom_call.1} parent=31 // pred_check
          %p304 = pneg %p215
        $region46: #{tpu_custom_call.1} parent=31 // pred_check_branch
          %306 = sbr.rel (%p304) target = $region48
        $region47: #{tpu_custom_call.1} parent=31 // pred_region
          %p307 = scmp.lt.s32.totalorder %s24, 1
          %s308 = scalar_select %p307, %s24, 1
          %p309 = scmp.lt.s32.totalorder %s25, 0
          %s310 = scalar_select %p309, %s25, 0
          %s311 = sadd.s32 %s310, %s308
          %s312 = smul.addr %s311, 8
          %s313 = scalar_lea.vmem %s7, %s312
        $region48: #{tpu_custom_call.1} parent=31 // pred_fallthru
          _
      $region32: #{tpu_custom_call.1} parent=5 // pred_fallthru
        _
      %p314 = scmp.le.s32.totalorder 1, %s17
      %p315 = scmp.lt.s32.totalorder %s17, 3
      %p316 = pnand %p314, %p315
      %p317 = pneg %p316
      // Predicated region
      $region49: #{tpu_custom_call.1} parent=5 // pred_check
        _
      $region50: #{tpu_custom_call.1} parent=5 // pred_check_branch
        %319 = sbr.rel (%p316) target = $region52
      $region51: #{tpu_custom_call.1} parent=5 // pred_region
        %s320 = ssub.s32 %s17, 1
        %p321 = scmp.lt.s32.totalorder %s26, 1
        %s322 = scalar_select %p321, %s26, 1
        %p323 = scmp.lt.s32.totalorder %s27, 0
        %s324 = scalar_select %p323, %s27, 0
        %s325 = sadd.s32 %s324, %s322
        %s326 = smul.addr %s325, 8
        %s327 = scalar_lea.vmem %s0, %s326
        %p328 = pneg %p57
        %p329 = pneg %p54
        %p330 = scmp.lt.s32.totalorder %s26, 1
        %s331 = scalar_select %p330, %s26, 1
        %s332 = smul.addr %s331, 8
        %s333 = smul.addr %s332, 8
        %s334 = scalar_lea.vmem %s1, %s333
        %p335 = pneg %p83
        %p336 = pneg %p80
        %p337 = pneg %p104
        %p338 = pneg %p101
        %p339 = pneg %p125
        %p340 = pneg %p122
        %p341 = pneg %p146
        %p342 = pneg %p143
        %p343 = pneg %p167
        %p344 = pneg %p164
        %p345 = scmp.lt.s32.totalorder %s26, 1
        %s346 = scalar_select %p345, %s26, 1
        %s347 = scalar_lea.vmem %s6, %s346
        %p348 = pneg %p193
        %p349 = pneg %p190
        %p350 = scmp.lt.s32.totalorder %s26, 1
        %s351 = scalar_select %p350, %s26, 1
        %p352 = scmp.lt.s32.totalorder %s27, 0
        %s353 = scalar_select %p352, %s27, 0
        %s354 = sadd.s32 %s353, %s351
        %s355 = smul.addr %s354, 8
        %s356 = scalar_lea.vmem %s7, %s355
        %p357 = pneg %p221
        %p358 = pneg %p218
        %p359 = pneg %p249
        %p360 = pneg %p246
        %s361 = sand.u32 %s236, 1
        %s362 = scalar_lea.sflag [#allocation5], %s361
        %s363 = sand.u32 %s236, 1
        %s364 = smul.addr %s363, 8
        %s365 = scalar_lea.vmem [#allocation4], %s364
        %p366 = scmp.lt.s32.totalorder %s26, 1
        %s367 = scalar_select %p366, %s26, 1
        %p368 = scmp.lt.s32.totalorder %s27, 0
        %s369 = scalar_select %p368, %s27, 0
        %s370 = sadd.s32 %s369, %s367
        %s371 = smul.addr %s370, 8
        %s372 = scalar_lea.vmem %s0, %s371
        %p373 = scmp.lt.s32.totalorder %s26, 1
        %s374 = scalar_select %p373, %s26, 1
        %s375 = smul.addr %s374, 8
        %s376 = smul.addr %s375, 8
        %s377 = scalar_lea.vmem %s1, %s376
        %p378 = scmp.lt.s32.totalorder %s26, 1
        %s379 = scalar_select %p378, %s26, 1
        %s380 = scalar_lea.vmem %s6, %s379
        %p381 = scmp.lt.s32.totalorder %s26, 1
        %s382 = scalar_select %p381, %s26, 1
        %p383 = scmp.lt.s32.totalorder %s27, 0
        %s384 = scalar_select %p383, %s27, 0
        %s385 = sadd.s32 %s384, %s382
        %s386 = smul.addr %s385, 8
        %s387 = scalar_lea.vmem %s7, %s386
        %p388 = scmp.eq.s32.totalorder %s27, 0
        // Predicated region
        $region53: #{tpu_custom_call.1} parent=51 // pred_check
          %p389 = pneg %p388
        $region54: #{tpu_custom_call.1} parent=51 // pred_check_branch
          %391 = sbr.rel (%p389) target = $region56
        $region55: #{tpu_custom_call.1} parent=51 // pred_region
          %v392 = vld [vmem:[%s377] sm:$0xff]
          %v393 = vld [vmem:[%s377 + $0x8] sm:$0xff]
          %v394 = vld [vmem:[%s377 + $0x10] sm:$0xff]
          %v395 = vld [vmem:[%s377 + $0x18] sm:$0xff]
          %v396 = vld [vmem:[%s377 + $0x20] sm:$0xff]
          %v397 = vld [vmem:[%s377 + $0x28] sm:$0xff]
          %v398 = vld [vmem:[%s377 + $0x30] sm:$0xff]
          %v399 = vld [vmem:[%s377 + $0x38] sm:$0xff]
          %v400 = vld [vmem:[%s4] sm:$0xff]
          %v401 = vld [vmem:[%s4 + $0x8] sm:$0xff]
          %v402 = vld [vmem:[%s4 + $0x10] sm:$0xff]
          %v403 = vld [vmem:[%s4 + $0x18] sm:$0xff]
          %v404 = vld [vmem:[%s4 + $0x20] sm:$0xff]
          %v405 = vld [vmem:[%s4 + $0x28] sm:$0xff]
          %v406 = vld [vmem:[%s4 + $0x30] sm:$0xff]
          %v407 = vld [vmem:[%s4 + $0x38] sm:$0xff]
          %v408 = vld [vmem:[%s5] sm:$0xff]
          %v409 = vld [vmem:[%s5 + $0x8] sm:$0xff]
          %v410 = vld [vmem:[%s5 + $0x10] sm:$0xff]
          %v411 = vld [vmem:[%s5 + $0x18] sm:$0xff]
          %v412 = vld [vmem:[%s5 + $0x20] sm:$0xff]
          %v413 = vld [vmem:[%s5 + $0x28] sm:$0xff]
          %v414 = vld [vmem:[%s5 + $0x30] sm:$0xff]
          %v415 = vld [vmem:[%s5 + $0x38] sm:$0xff]
          %417 = vset.pattern.permute.xlu0 0
          %418 = vperm.xlu0 %417, %v408
          %v419 = vpop.permute.xlu0 %418
          %422 = vset.pattern.permute.xlu0 0
          %423 = vperm.xlu0 %422, %v409
          %v424 = vpop.permute.xlu0 %423
          %427 = vset.pattern.permute.xlu0 0
          %428 = vperm.xlu0 %427, %v410
          %v429 = vpop.permute.xlu0 %428
          %432 = vset.pattern.permute.xlu0 0
          %433 = vperm.xlu0 %432, %v411
          %v434 = vpop.permute.xlu0 %433
          %437 = vset.pattern.permute.xlu0 0
          %438 = vperm.xlu0 %437, %v412
          %v439 = vpop.permute.xlu0 %438
          %442 = vset.pattern.permute.xlu0 0
          %443 = vperm.xlu0 %442, %v413
          %v444 = vpop.permute.xlu0 %443
          %447 = vset.pattern.permute.xlu0 0
          %448 = vperm.xlu0 %447, %v414
          %v449 = vpop.permute.xlu0 %448
          %452 = vset.pattern.permute.xlu0 0
          %453 = vperm.xlu0 %452, %v415
          %v454 = vpop.permute.xlu0 %453
          %vm456 = vcmask 261120
          %v458 = vsel %vm456, %v400, 0
          %v461 = vsel %vm456, %v401, 0
          %v464 = vsel %vm456, %v402, 0
          %v467 = vsel %vm456, %v403, 0
          %469 = vmatprep.subr.mxu0 0.0
          %470 = vmatpush1.msra.mxu0 %v392
          %471 = vmatprep.subr.mxu0 0.0
          %472 = vmatpush1.msra.mxu0 %v393
          %473 = vmatprep.subr.mxu0 0.0
          %474 = vmatpush1.msra.mxu0 %v394
          %475 = vmatprep.subr.mxu0 0.0
          %476 = vmatpush1.msra.mxu0 %v395
          %477 = vmatprep.subr.mxu0 0.0
          %478 = vmatpush1.msra.mxu0 0.0
          %479 = vmatprep.subr.mxu0 0.0
          %480 = vmatpush1.msra.mxu0 0.0
          %481 = vmatprep.subr.mxu0 0.0
          %482 = vmatpush1.msra.mxu0 0.0
          %483 = vmatprep.subr.mxu0 0.0
          %484 = vmatpush1.msra.mxu0 0.0
          %485 = vmatprep.subr.mxu0 0.0
          %486 = vmatpush1.msra.mxu0 0.0
          %487 = vmatprep.subr.mxu0 0.0
          %488 = vmatpush1.msra.mxu0 0.0
          %489 = vmatprep.subr.mxu0 0.0
          %490 = vmatpush1.msra.mxu0 0.0
          %491 = vmatprep.subr.mxu0 0.0
          %492 = vmatpush1.msra.mxu0 0.0
          %493 = vmatprep.subr.mxu0 0.0
          %494 = vmatpush1.msra.mxu0 0.0
          %495 = vmatprep.subr.mxu0 0.0
          %496 = vmatpush1.msra.mxu0 0.0
          %497 = vmatprep.subr.mxu0 0.0
          %498 = vmatpush1.msra.mxu0 0.0
          %499 = vmatprep.subr.mxu0 0.0
          %500 = vmatpush1.msra.mxu0 0.0
          %501 = vmatprep.subr.mxu0 0.0
          %502 = vmatpush1.msra.mxu0 0.0
          %503 = vmatprep.subr.mxu0 0.0
          %504 = vmatpush1.msra.mxu0 0.0
          %505 = vmatprep.subr.mxu0 0.0
          %506 = vmatpush1.msra.mxu0 0.0
          %507 = vmatprep.subr.mxu0 0.0
          %508 = vmatpush1.msra.mxu0 0.0
          %509 = vmatprep.subr.mxu0 0.0
          %510 = vmatpush1.msra.mxu0 0.0
          %511 = vmatprep.subr.mxu0 0.0
          %512 = vmatpush1.msra.mxu0 0.0
          %513 = vmatprep.subr.mxu0 0.0
          %514 = vmatpush1.msra.mxu0 0.0
          %515 = vmatprep.subr.mxu0 0.0
          %516 = vmatpush1.msra.mxu0 0.0
          %517 = vmatprep.subr.mxu0 0.0
          %518 = vmatpush1.msra.mxu0 0.0
          %519 = vmatprep.subr.mxu0 0.0
          %520 = vmatpush1.msra.mxu0 0.0
          %521 = vmatprep.subr.mxu0 0.0
          %522 = vmatpush1.msra.mxu0 0.0
          %523 = vmatprep.subr.mxu0 0.0
          %524 = vmatpush1.msra.mxu0 0.0
          %525 = vmatprep.subr.mxu0 0.0
          %526 = vmatpush1.msra.mxu0 0.0
          %527 = vmatprep.subr.mxu0 0.0
          %528 = vmatpush1.msra.mxu0 0.0
          %529 = vmatprep.subr.mxu0 0.0
          %530 = vmatpush1.msra.mxu0 0.0
          %531 = vmatprep.subr.mxu0 0.0
          %532 = vmatpush1.msra.mxu0 0.0
          %533 = vmatprep.mubr.f32.mxu0 0.0
          %534 = vmatmul.mubr.f32.gmra.mrb[0].mxu0 %v458
          %v535 = vpop.f32.mrb[0].mxu0
          %v536 = vadd.f32 %v419, %v535
          %v537 = vpop.f32.mrb[0].mxu0
          %538 = vmatprep.mubr.f32.mxu0 0.0
          %539 = vmatmul.mubr.f32.gmra.mrb[0].mxu0 %v461
          %v540 = vpop.f32.mrb[0].mxu0
          %v541 = vadd.f32 %v424, %v540
          %v542 = vpop.f32.mrb[0].mxu0
          %543 = vmatprep.mubr.f32.mxu0 0.0
          %544 = vmatmul.mubr.f32.gmra.mrb[0].mxu0 %v464
          %v545 = vpop.f32.mrb[0].mxu0
          %v546 = vadd.f32 %v429, %v545
          %v547 = vpop.f32.mrb[0].mxu0
          %548 = vmatprep.mubr.f32.mxu0 0.0
          %549 = vmatmul.mubr.f32.gmra.mrb[0].mxu0 %v467
          %v550 = vpop.f32.mrb[0].mxu0
          %v551 = vadd.f32 %v434, %v550
          %v552 = vpop.f32.mrb[0].mxu0
          %553 = vdwg.mxu0
          %v555 = vsel %vm456, %v404, 0
          %v558 = vsel %vm456, %v405, 0
          %v561 = vsel %vm456, %v406, 0
          %v564 = vsel %vm456, %v407, 0
          %566 = vmatprep.subr.mxu0 0.0
          %567 = vmatpush1.msra.mxu0 %v396
          %568 = vmatprep.subr.mxu0 0.0
          %569 = vmatpush1.msra.mxu0 %v397
          %570 = vmatprep.subr.mxu0 0.0
          %571 = vmatpush1.msra.mxu0 %v398
          %572 = vmatprep.subr.mxu0 0.0
          %573 = vmatpush1.msra.mxu0 %v399
          %574 = vmatprep.subr.mxu0 0.0
          %575 = vmatpush1.msra.mxu0 0.0
          %576 = vmatprep.subr.mxu0 0.0
          %577 = vmatpush1.msra.mxu0 0.0
          %578 = vmatprep.subr.mxu0 0.0
          %579 = vmatpush1.msra.mxu0 0.0
          %580 = vmatprep.subr.mxu0 0.0
          %581 = vmatpush1.msra.mxu0 0.0
          %582 = vmatprep.subr.mxu0 0.0
          %583 = vmatpush1.msra.mxu0 0.0
          %584 = vmatprep.subr.mxu0 0.0
          %585 = vmatpush1.msra.mxu0 0.0
          %586 = vmatprep.subr.mxu0 0.0
          %587 = vmatpush1.msra.mxu0 0.0
          %588 = vmatprep.subr.mxu0 0.0
          %589 = vmatpush1.msra.mxu0 0.0
          %590 = vmatprep.subr.mxu0 0.0
          %591 = vmatpush1.msra.mxu0 0.0
          %592 = vmatprep.subr.mxu0 0.0
          %593 = vmatpush1.msra.mxu0 0.0
          %594 = vmatprep.subr.mxu0 0.0
          %595 = vmatpush1.msra.mxu0 0.0
          %596 = vmatprep.subr.mxu0 0.0
          %597 = vmatpush1.msra.mxu0 0.0
          %598 = vmatprep.subr.mxu0 0.0
          %599 = vmatpush1.msra.mxu0 0.0
          %600 = vmatprep.subr.mxu0 0.0
          %601 = vmatpush1.msra.mxu0 0.0
          %602 = vmatprep.subr.mxu0 0.0
          %603 = vmatpush1.msra.mxu0 0.0
          %604 = vmatprep.subr.mxu0 0.0
          %605 = vmatpush1.msra.mxu0 0.0
          %606 = vmatprep.subr.mxu0 0.0
          %607 = vmatpush1.msra.mxu0 0.0
          %608 = vmatprep.subr.mxu0 0.0
          %609 = vmatpush1.msra.mxu0 0.0
          %610 = vmatprep.subr.mxu0 0.0
          %611 = vmatpush1.msra.mxu0 0.0
          %612 = vmatprep.subr.mxu0 0.0
          %613 = vmatpush1.msra.mxu0 0.0
          %614 = vmatprep.subr.mxu0 0.0
          %615 = vmatpush1.msra.mxu0 0.0
          %616 = vmatprep.subr.mxu0 0.0
          %617 = vmatpush1.msra.mxu0 0.0
          %618 = vmatprep.subr.mxu0 0.0
          %619 = vmatpush1.msra.mxu0 0.0
          %620 = vmatprep.subr.mxu0 0.0
          %621 = vmatpush1.msra.mxu0 0.0
          %622 = vmatprep.subr.mxu0 0.0
          %623 = vmatpush1.msra.mxu0 0.0
          %624 = vmatprep.subr.mxu0 0.0
          %625 = vmatpush1.msra.mxu0 0.0
          %626 = vmatprep.subr.mxu0 0.0
          %627 = vmatpush1.msra.mxu0 0.0
          %628 = vmatprep.subr.mxu0 0.0
          %629 = vmatpush1.msra.mxu0 0.0
          %630 = vmatprep.mubr.f32.mxu0 0.0
          %631 = vmatmul.mubr.f32.gmra.mrb[0].mxu0 %v555
          %v632 = vpop.f32.mrb[0].mxu0
          %v633 = vadd.f32 %v439, %v632
          %v634 = vpop.f32.mrb[0].mxu0
          %635 = vmatprep.mubr.f32.mxu0 0.0
          %636 = vmatmul.mubr.f32.gmra.mrb[0].mxu0 %v558
          %v637 = vpop.f32.mrb[0].mxu0
          %v638 = vadd.f32 %v444, %v637
          %v639 = vpop.f32.mrb[0].mxu0
          %640 = vmatprep.mubr.f32.mxu0 0.0
          %641 = vmatmul.mubr.f32.gmra.mrb[0].mxu0 %v561
          %v642 = vpop.f32.mrb[0].mxu0
          %v643 = vadd.f32 %v449, %v642
          %v644 = vpop.f32.mrb[0].mxu0
          %645 = vmatprep.mubr.f32.mxu0 0.0
          %646 = vmatmul.mubr.f32.gmra.mrb[0].mxu0 %v564
          %v647 = vpop.f32.mrb[0].mxu0
          %v648 = vadd.f32 %v454, %v647
          %v649 = vpop.f32.mrb[0].mxu0
          %650 = vdwg.mxu0
          %vm651 = vcmask 64512
          %652 = vst.msk [vmem:[#allocation2] sm:$0xff] %vm651, %v536
          %653 = vst.msk [vmem:[#allocation2 + $0x8] sm:$0xff] %vm651, %v541
          %654 = vst.msk [vmem:[#allocation3] sm:$0xff] %vm651, %v633
          %655 = vst.msk [vmem:[#allocation3 + $0x8] sm:$0xff] %vm651, %v638
          %s656 = scalar_lea.vmem [#allocation2], 16
          %657 = vst.msk [vmem:[%s656] sm:$0xff] %vm651, %v546
          %658 = vst.msk [vmem:[%s656 + $0x8] sm:$0xff] %vm651, %v551
          %s659 = scalar_lea.vmem [#allocation3], 16
          %660 = vst.msk [vmem:[%s659] sm:$0xff] %vm651, %v643
          %661 = vst.msk [vmem:[%s659 + $0x8] sm:$0xff] %vm651, %v648
        $region56: #{tpu_custom_call.1} parent=51 // pred_fallthru
          _
        %v662 = vld [vmem:[%s372] sm:$0xff]
        %v663 = vld [vmem:[%s2] sm:$0xff]
        %v664 = vld [vmem:[%s2 + $0x8] sm:$0xff]
        %v665 = vld [vmem:[%s2 + $0x10] sm:$0xff]
        %v666 = vld [vmem:[%s2 + $0x18] sm:$0xff]
        %v667 = vld [vmem:[%s3] sm:$0x1]
        %v669 = vlaneseq
        %v670 = vshrl.u32 %v669, 7
        %v671 = vsub.s32 0, %v670
        %v672 = vrot.slane %v667, %v671
        %vm674 = vcmask 261120
        %v676 = vsel %vm674, %v662, 0
        %678 = vmatprep.subr.mxu0 0.0
        %679 = vmatpush1.msra.mxu0 %v663
        %680 = vmatprep.subr.mxu0 0.0
        %681 = vmatpush1.msra.mxu0 %v664
        %682 = vmatprep.subr.mxu0 0.0
        %683 = vmatpush1.msra.mxu0 %v665
        %684 = vmatprep.subr.mxu0 0.0
        %685 = vmatpush1.msra.mxu0 %v666
        %686 = vmatprep.subr.mxu0 0.0
        %687 = vmatpush1.msra.mxu0 0.0
        %688 = vmatprep.subr.mxu0 0.0
        %689 = vmatpush1.msra.mxu0 0.0
        %690 = vmatprep.subr.mxu0 0.0
        %691 = vmatpush1.msra.mxu0 0.0
        %692 = vmatprep.subr.mxu0 0.0
        %693 = vmatpush1.msra.mxu0 0.0
        %694 = vmatprep.subr.mxu0 0.0
        %695 = vmatpush1.msra.mxu0 0.0
        %696 = vmatprep.subr.mxu0 0.0
        %697 = vmatpush1.msra.mxu0 0.0
        %698 = vmatprep.subr.mxu0 0.0
        %699 = vmatpush1.msra.mxu0 0.0
        %700 = vmatprep.subr.mxu0 0.0
        %701 = vmatpush1.msra.mxu0 0.0
        %702 = vmatprep.subr.mxu0 0.0
        %703 = vmatpush1.msra.mxu0 0.0
        %704 = vmatprep.subr.mxu0 0.0
        %705 = vmatpush1.msra.mxu0 0.0
        %706 = vmatprep.subr.mxu0 0.0
        %707 = vmatpush1.msra.mxu0 0.0
        %708 = vmatprep.subr.mxu0 0.0
        %709 = vmatpush1.msra.mxu0 0.0
        %710 = vmatprep.subr.mxu0 0.0
        %711 = vmatpush1.msra.mxu0 0.0
        %712 = vmatprep.subr.mxu0 0.0
        %713 = vmatpush1.msra.mxu0 0.0
        %714 = vmatprep.subr.mxu0 0.0
        %715 = vmatpush1.msra.mxu0 0.0
        %716 = vmatprep.subr.mxu0 0.0
        %717 = vmatpush1.msra.mxu0 0.0
        %718 = vmatprep.subr.mxu0 0.0
        %719 = vmatpush1.msra.mxu0 0.0
        %720 = vmatprep.subr.mxu0 0.0
        %721 = vmatpush1.msra.mxu0 0.0
        %722 = vmatprep.subr.mxu0 0.0
        %723 = vmatpush1.msra.mxu0 0.0
        %724 = vmatprep.subr.mxu0 0.0
        %725 = vmatpush1.msra.mxu0 0.0
        %726 = vmatprep.subr.mxu0 0.0
        %727 = vmatpush1.msra.mxu0 0.0
        %728 = vmatprep.subr.mxu0 0.0
        %729 = vmatpush1.msra.mxu0 0.0
        %730 = vmatprep.subr.mxu0 0.0
        %731 = vmatpush1.msra.mxu0 0.0
        %732 = vmatprep.subr.mxu0 0.0
        %733 = vmatpush1.msra.mxu0 0.0
        %734 = vmatprep.subr.mxu0 0.0
        %735 = vmatpush1.msra.mxu0 0.0
        %736 = vmatprep.subr.mxu0 0.0
        %737 = vmatpush1.msra.mxu0 0.0
        %738 = vmatprep.subr.mxu0 0.0
        %739 = vmatpush1.msra.mxu0 0.0
        %740 = vmatprep.subr.mxu0 0.0
        %741 = vmatpush1.msra.mxu0 0.0
        %742 = vmatprep.mubr.f32.mxu0 0.0
        %743 = vmatmul.mubr.f32.gmra.mrb[0].mxu0 %v676
        %v744 = vpop.f32.mrb[0].mxu0
        %v745 = vadd.f32 %v672, %v744
        %v746 = vpop.f32.mrb[0].mxu0
        %747 = vdwg.mxu0
        %v748 = vmul.f32 %v745, 0.25
        %750 = vrot.lane.b32.xlu0 %v748, 112
        %v751 = vpop.permute.xlu0 %750
        %v753 = vcombine.high %v748, 0.0
        %v755 = vunpack.c.l.s4 1983009808
        %v756 = vunpack.c.0.s8 %v755
        %v757 = vlaneseq
        %v758 = vshrl.u32 %v757, 7
        %v759 = vsub.s32 %v756, %v758
        %v760 = vrot.slane %v748, %v759
        %v762 = vunpack.c.l.s4 1983009808
        %v763 = vunpack.c.0.s8 %v762
        %v764 = vlaneseq
        %v765 = vshrl.u32 %v764, 7
        %v766 = vsub.s32 %v763, %v765
        %v767 = vrot.slane %v753, %v766
        %v768 = vcombine.high %v751, 0.0
        %v770 = vunpack.c.l.s4 1983009808
        %v771 = vunpack.c.0.s8 %v770
        %v772 = vlaneseq
        %v773 = vshrl.u32 %v772, 7
        %v774 = vsub.s32 %v771, %v773
        %v775 = vrot.slane %v751, %v774
        %v777 = vunpack.c.l.s4 1983009808
        %v778 = vunpack.c.0.s8 %v777
        %v779 = vlaneseq
        %v780 = vshrl.u32 %v779, 7
        %v781 = vsub.s32 %v778, %v780
        %v782 = vrot.slane %v768, %v781
        %v783 = vcombine.low %v760, %v775
        %v784 = vcombine.high %v760, %v775
        %v786 = vunpack.c.l.s4 1934713408
        %v787 = vunpack.c.0.s8 %v786
        %v788 = vlaneseq
        %v789 = vshrl.u32 %v788, 7
        %v790 = vsub.s32 %v787, %v789
        %v791 = vrot.slane %v783, %v790
        %v793 = vunpack.c.l.s4 1934713408
        %v794 = vunpack.c.0.s8 %v793
        %v795 = vlaneseq
        %v796 = vshrl.u32 %v795, 7
        %v797 = vsub.s32 %v794, %v796
        %v798 = vrot.slane %v784, %v797
        %v799 = vcombine.low %v767, %v782
        %v800 = vcombine.high %v767, %v782
        %v802 = vunpack.c.l.s4 1934713408
        %v803 = vunpack.c.0.s8 %v802
        %v804 = vlaneseq
        %v805 = vshrl.u32 %v804, 7
        %v806 = vsub.s32 %v803, %v805
        %v807 = vrot.slane %v799, %v806
        %v809 = vunpack.c.l.s4 1934713408
        %v810 = vunpack.c.0.s8 %v809
        %v811 = vlaneseq
        %v812 = vshrl.u32 %v811, 7
        %v813 = vsub.s32 %v810, %v812
        %v814 = vrot.slane %v800, %v813
        %v815 = vcombine.high %v791, 0.0
        %v816 = vcombine.high %v798, 0.0
        %v817 = vcombine.high %v807, 0.0
        %v818 = vcombine.high %v814, 0.0
        %v819 = vcombine.low %v791, %v798
        %v821 = vunpack.c.l.s4 1983009808
        %v822 = vunpack.c.0.s8 %v821
        %v823 = vlaneseq
        %v824 = vshrl.u32 %v823, 7
        %v825 = vsub.s32 %v822, %v824
        %v826 = vrot.slane %v819, %v825
        %v827 = vcombine.low %v815, %v816
        %v829 = vunpack.c.l.s4 1983009808
        %v830 = vunpack.c.0.s8 %v829
        %v831 = vlaneseq
        %v832 = vshrl.u32 %v831, 7
        %v833 = vsub.s32 %v830, %v832
        %v834 = vrot.slane %v827, %v833
        %v835 = vcombine.low %v807, %v814
        %v837 = vunpack.c.l.s4 1983009808
        %v838 = vunpack.c.0.s8 %v837
        %v839 = vlaneseq
        %v840 = vshrl.u32 %v839, 7
        %v841 = vsub.s32 %v838, %v840
        %v842 = vrot.slane %v835, %v841
        %v843 = vcombine.low %v817, %v818
        %v845 = vunpack.c.l.s4 1983009808
        %v846 = vunpack.c.0.s8 %v845
        %v847 = vlaneseq
        %v848 = vshrl.u32 %v847, 7
        %v849 = vsub.s32 %v846, %v848
        %v850 = vrot.slane %v843, %v849
        %v851 = vcombine.low %v826, %v834
        %v853 = vunpack.c.l.s4 1934713408
        %v854 = vunpack.c.0.s8 %v853
        %v855 = vlaneseq
        %v856 = vshrl.u32 %v855, 7
        %v857 = vsub.s32 %v854, %v856
        %v858 = vrot.slane %v851, %v857
        %v859 = vcombine.low %v842, %v850
        %v861 = vunpack.c.l.s4 1934713408
        %v862 = vunpack.c.0.s8 %v861
        %v863 = vlaneseq
        %v864 = vshrl.u32 %v863, 7
        %v865 = vsub.s32 %v862, %v864
        %v866 = vrot.slane %v859, %v865
        %v867 = vcombine.low %v858, %v866
        %v868 = vcombine.high %v858, %v866
        %v869 = vld [vmem:[#allocation2] sm:$0xff]
        %v870 = vld [vmem:[#allocation2 + $0x8] sm:$0xff]
        %v871 = vld [vmem:[#allocation2 + $0x10] sm:$0xff]
        %v872 = vld [vmem:[#allocation2 + $0x18] sm:$0xff]
        %v873 = vld [vmem:[%s380] sm:$0x1]
        %v875 = vlaneseq
        %v876 = vshrl.u32 %v875, 7
        %v877 = vsub.s32 0, %v876
        %v878 = vrot.slane %v873, %v877
        %vm880 = vcmask 130048
        %v882 = vsel %vm880, %v867, 0
        %884 = vmatprep.subr.mxu0 0.0
        %885 = vmatpush1.msra.mxu0 %v869
        %886 = vmatprep.subr.mxu0 0.0
        %887 = vmatpush1.msra.mxu0 %v870
        %888 = vmatprep.subr.mxu0 0.0
        %889 = vmatpush1.msra.mxu0 0.0
        %890 = vmatprep.subr.mxu0 0.0
        %891 = vmatpush1.msra.mxu0 0.0
        %892 = vmatprep.subr.mxu0 0.0
        %893 = vmatpush1.msra.mxu0 0.0
        %894 = vmatprep.subr.mxu0 0.0
        %895 = vmatpush1.msra.mxu0 0.0
        %896 = vmatprep.subr.mxu0 0.0
        %897 = vmatpush1.msra.mxu0 0.0
        %898 = vmatprep.subr.mxu0 0.0
        %899 = vmatpush1.msra.mxu0 0.0
        %900 = vmatprep.subr.mxu0 0.0
        %901 = vmatpush1.msra.mxu0 0.0
        %902 = vmatprep.subr.mxu0 0.0
        %903 = vmatpush1.msra.mxu0 0.0
        %904 = vmatprep.subr.mxu0 0.0
        %905 = vmatpush1.msra.mxu0 0.0
        %906 = vmatprep.subr.mxu0 0.0
        %907 = vmatpush1.msra.mxu0 0.0
        %908 = vmatprep.subr.mxu0 0.0
        %909 = vmatpush1.msra.mxu0 0.0
        %910 = vmatprep.subr.mxu0 0.0
        %911 = vmatpush1.msra.mxu0 0.0
        %912 = vmatprep.subr.mxu0 0.0
        %913 = vmatpush1.msra.mxu0 0.0
        %914 = vmatprep.subr.mxu0 0.0
        %915 = vmatpush1.msra.mxu0 0.0
        %916 = vmatprep.subr.mxu0 0.0
        %917 = vmatpush1.msra.mxu0 0.0
        %918 = vmatprep.subr.mxu0 0.0
        %919 = vmatpush1.msra.mxu0 0.0
        %920 = vmatprep.subr.mxu0 0.0
        %921 = vmatpush1.msra.mxu0 0.0
        %922 = vmatprep.subr.mxu0 0.0
        %923 = vmatpush1.msra.mxu0 0.0
        %924 = vmatprep.subr.mxu0 0.0
        %925 = vmatpush1.msra.mxu0 0.0
        %926 = vmatprep.subr.mxu0 0.0
        %927 = vmatpush1.msra.mxu0 0.0
        %928 = vmatprep.subr.mxu0 0.0
        %929 = vmatpush1.msra.mxu0 0.0
        %930 = vmatprep.subr.mxu0 0.0
        %931 = vmatpush1.msra.mxu0 0.0
        %932 = vmatprep.subr.mxu0 0.0
        %933 = vmatpush1.msra.mxu0 0.0
        %934 = vmatprep.subr.mxu0 0.0
        %935 = vmatpush1.msra.mxu0 0.0
        %936 = vmatprep.subr.mxu0 0.0
        %937 = vmatpush1.msra.mxu0 0.0
        %938 = vmatprep.subr.mxu0 0.0
        %939 = vmatpush1.msra.mxu0 0.0
        %940 = vmatprep.subr.mxu0 0.0
        %941 = vmatpush1.msra.mxu0 0.0
        %942 = vmatprep.subr.mxu0 0.0
        %943 = vmatpush1.msra.mxu0 0.0
        %944 = vmatprep.subr.mxu0 0.0
        %945 = vmatpush1.msra.mxu0 0.0
        %946 = vmatprep.subr.mxu0 0.0
        %947 = vmatpush1.msra.mxu0 0.0
        %948 = vmatprep.mubr.f32.mxu0 0.0
        %949 = vmatmul.mubr.f32.gmra.mrb[0].mxu0 %v882
        %v950 = vpop.f32.mrb[0].mxu0
        %v951 = vadd.f32 %v878, %v950
        %v952 = vpop.f32.mrb[0].mxu0
        %953 = vdwg.mxu0
        %v955 = vsel %vm880, %v868, 0
        %957 = vmatprep.subr.mxu0 0.0
        %958 = vmatpush1.msra.mxu0 %v871
        %959 = vmatprep.subr.mxu0 0.0
        %960 = vmatpush1.msra.mxu0 %v872
        %961 = vmatprep.subr.mxu0 0.0
        %962 = vmatpush1.msra.mxu0 0.0
        %963 = vmatprep.subr.mxu0 0.0
        %964 = vmatpush1.msra.mxu0 0.0
        %965 = vmatprep.subr.mxu0 0.0
        %966 = vmatpush1.msra.mxu0 0.0
        %967 = vmatprep.subr.mxu0 0.0
        %968 = vmatpush1.msra.mxu0 0.0
        %969 = vmatprep.subr.mxu0 0.0
        %970 = vmatpush1.msra.mxu0 0.0
        %971 = vmatprep.subr.mxu0 0.0
        %972 = vmatpush1.msra.mxu0 0.0
        %973 = vmatprep.subr.mxu0 0.0
        %974 = vmatpush1.msra.mxu0 0.0
        %975 = vmatprep.subr.mxu0 0.0
        %976 = vmatpush1.msra.mxu0 0.0
        %977 = vmatprep.subr.mxu0 0.0
        %978 = vmatpush1.msra.mxu0 0.0
        %979 = vmatprep.subr.mxu0 0.0
        %980 = vmatpush1.msra.mxu0 0.0
        %981 = vmatprep.subr.mxu0 0.0
        %982 = vmatpush1.msra.mxu0 0.0
        %983 = vmatprep.subr.mxu0 0.0
        %984 = vmatpush1.msra.mxu0 0.0
        %985 = vmatprep.subr.mxu0 0.0
        %986 = vmatpush1.msra.mxu0 0.0
        %987 = vmatprep.subr.mxu0 0.0
        %988 = vmatpush1.msra.mxu0 0.0
        %989 = vmatprep.subr.mxu0 0.0
        %990 = vmatpush1.msra.mxu0 0.0
        %991 = vmatprep.subr.mxu0 0.0
        %992 = vmatpush1.msra.mxu0 0.0
        %993 = vmatprep.subr.mxu0 0.0
        %994 = vmatpush1.msra.mxu0 0.0
        %995 = vmatprep.subr.mxu0 0.0
        %996 = vmatpush1.msra.mxu0 0.0
        %997 = vmatprep.subr.mxu0 0.0
        %998 = vmatpush1.msra.mxu0 0.0
        %999 = vmatprep.subr.mxu0 0.0
        %1000 = vmatpush1.msra.mxu0 0.0
        %1001 = vmatprep.subr.mxu0 0.0
        %1002 = vmatpush1.msra.mxu0 0.0
        %1003 = vmatprep.subr.mxu0 0.0
        %1004 = vmatpush1.msra.mxu0 0.0
        %1005 = vmatprep.subr.mxu0 0.0
        %1006 = vmatpush1.msra.mxu0 0.0
        %1007 = vmatprep.subr.mxu0 0.0
        %1008 = vmatpush1.msra.mxu0 0.0
        %1009 = vmatprep.subr.mxu0 0.0
        %1010 = vmatpush1.msra.mxu0 0.0
        %1011 = vmatprep.subr.mxu0 0.0
        %1012 = vmatpush1.msra.mxu0 0.0
        %1013 = vmatprep.subr.mxu0 0.0
        %1014 = vmatpush1.msra.mxu0 0.0
        %1015 = vmatprep.subr.mxu0 0.0
        %1016 = vmatpush1.msra.mxu0 0.0
        %1017 = vmatprep.subr.mxu0 0.0
        %1018 = vmatpush1.msra.mxu0 0.0
        %1019 = vmatprep.subr.mxu0 0.0
        %1020 = vmatpush1.msra.mxu0 0.0
        %1021 = vmatprep.mubr.f32.mxu0 0.0
        %1022 = vmatmul.mubr.f32.gmra.mrb[0].mxu0 %v955
        %v1023 = vpop.f32.mrb[0].mxu0
        %v1024 = vadd.f32 %v878, %v1023
        %v1025 = vpop.f32.mrb[0].mxu0
        %1026 = vdwg.mxu0
        %vm1027 = vcmask 64512
        %v1028 = vsel %vm1027, %v951, -inf
        %1029 = vmax.xlane.f32.xlu0 %v1028
        %v1030 = vpop.xlane.xlu0 %1029
        %v1031 = vsel %vm1027, %v1024, -inf
        %1032 = vmax.xlane.f32.xlu0 %v1031
        %v1033 = vpop.xlane.xlu0 %1032
        %v1034 = vsub.f32 %v951, %v1030
        %v1035 = vsub.f32 %v1024, %v1033
        %v1036 = vmul.f32 %v1034, 1.442695
        %v1037 = vpow.pop %v1036
        %v1038 = vmul.f32 %v1035, 1.442695
        %v1039 = vpow.pop %v1038
        %v1040 = vsel %vm1027, %v1037, 0.0
        %1041 = vadd.xlane.f32.xlu0 %v1040
        %v1042 = vpop.xlane.xlu0 %1041
        %v1043 = vsel %vm1027, %v1039, 0.0
        %1044 = vadd.xlane.f32.xlu0 %v1043
        %v1045 = vpop.xlane.xlu0 %1044
        %v1046 = vrcp.pop %v1042
        %v1047 = vrcp.pop %v1045
        %v1048 = vmul.f32 %v1042, %v1046
        %v1049 = vmul.f32 %v1045, %v1047
        %v1050 = vsub.f32 2.0, %v1048
        %v1051 = vsub.f32 2.0, %v1049
        %v1052 = vmul.f32 %v1046, %v1050
        %v1053 = vmul.f32 %v1047, %v1051
        %v1054 = vmul.f32 %v1037, %v1052
        %v1055 = vmul.f32 %v1039, %v1053
        %v1056 = vld [vmem:[#allocation3] sm:$0xff]
        %v1057 = vld [vmem:[#allocation3 + $0x8] sm:$0xff]
        %v1058 = vld [vmem:[#allocation3 + $0x10] sm:$0xff]
        %v1059 = vld [vmem:[#allocation3 + $0x18] sm:$0xff]
        %v1061 = vsel %vm1027, %v1054, 0
        %v1064 = vsel %vm1027, %v1056, 0
        %v1067 = vsel %vm1027, %v1057, 0
        %1069 = vmatprep.subr.mxu0 0.0
        %1070 = vmatpush1.xpose.msra.mxu0 %v1064
        %1071 = vmatprep.subr.mxu0 0.0
        %1072 = vmatpush1.xpose.msra.mxu0 %v1067
        %1073 = vmatprep.subr.mxu0 0.0
        %1074 = vmatpush1.xpose.msra.mxu0 0.0
        %1075 = vmatprep.subr.mxu0 0.0
        %1076 = vmatpush1.xpose.msra.mxu0 0.0
        %1077 = vmatprep.subr.mxu0 0.0
        %1078 = vmatpush1.xpose.msra.mxu0 0.0
        %1079 = vmatprep.subr.mxu0 0.0
        %1080 = vmatpush1.xpose.msra.mxu0 0.0
        %1081 = vmatprep.subr.mxu0 0.0
        %1082 = vmatpush1.xpose.msra.mxu0 0.0
        %1083 = vmatprep.subr.mxu0 0.0
        %1084 = vmatpush1.xpose.msra.mxu0 0.0
        %1085 = vmatprep.subr.mxu0 0.0
        %1086 = vmatpush1.xpose.msra.mxu0 0.0
        %1087 = vmatprep.subr.mxu0 0.0
        %1088 = vmatpush1.xpose.msra.mxu0 0.0
        %1089 = vmatprep.subr.mxu0 0.0
        %1090 = vmatpush1.xpose.msra.mxu0 0.0
        %1091 = vmatprep.subr.mxu0 0.0
        %1092 = vmatpush1.xpose.msra.mxu0 0.0
        %1093 = vmatprep.subr.mxu0 0.0
        %1094 = vmatpush1.xpose.msra.mxu0 0.0
        %1095 = vmatprep.subr.mxu0 0.0
        %1096 = vmatpush1.xpose.msra.mxu0 0.0
        %1097 = vmatprep.subr.mxu0 0.0
        %1098 = vmatpush1.xpose.msra.mxu0 0.0
        %1099 = vmatprep.subr.mxu0 0.0
        %1100 = vmatpush1.xpose.msra.mxu0 0.0
        %1101 = vmatprep.subr.mxu0 0.0
        %1102 = vmatpush1.xpose.msra.mxu0 0.0
        %1103 = vmatprep.subr.mxu0 0.0
        %1104 = vmatpush1.xpose.msra.mxu0 0.0
        %1105 = vmatprep.subr.mxu0 0.0
        %1106 = vmatpush1.xpose.msra.mxu0 0.0
        %1107 = vmatprep.subr.mxu0 0.0
        %1108 = vmatpush1.xpose.msra.mxu0 0.0
        %1109 = vmatprep.subr.mxu0 0.0
        %1110 = vmatpush1.xpose.msra.mxu0 0.0
        %1111 = vmatprep.subr.mxu0 0.0
        %1112 = vmatpush1.xpose.msra.mxu0 0.0
        %1113 = vmatprep.subr.mxu0 0.0
        %1114 = vmatpush1.xpose.msra.mxu0 0.0
        %1115 = vmatprep.subr.mxu0 0.0
        %1116 = vmatpush1.xpose.msra.mxu0 0.0
        %1117 = vmatprep.subr.mxu0 0.0
        %1118 = vmatpush1.xpose.msra.mxu0 0.0
        %1119 = vmatprep.subr.mxu0 0.0
        %1120 = vmatpush1.xpose.msra.mxu0 0.0
        %1121 = vmatprep.subr.mxu0 0.0
        %1122 = vmatpush1.xpose.msra.mxu0 0.0
        %1123 = vmatprep.subr.mxu0 0.0
        %1124 = vmatpush1.xpose.msra.mxu0 0.0
        %1125 = vmatprep.subr.mxu0 0.0
        %1126 = vmatpush1.xpose.msra.mxu0 0.0
        %1127 = vmatprep.subr.mxu0 0.0
        %1128 = vmatpush1.xpose.msra.mxu0 0.0
        %1129 = vmatprep.subr.mxu0 0.0
        %1130 = vmatpush1.xpose.msra.mxu0 0.0
        %1131 = vmatprep.subr.mxu0 0.0
        %1132 = vmatpush1.xpose.msra.mxu0 0.0
        %1133 = vmatprep.mubr.f32.mxu0 0.0
        %1134 = vmatmul.mubr.f32.gmra.mrb[0].mxu0 %v1061
        %v1135 = vpop.f32.mrb[0].mxu0
        %v1136 = vadd.f32 0.0, %v1135
        %v1137 = vpop.f32.mrb[0].mxu0
        %1138 = vdwg.mxu0
        %v1140 = vsel %vm1027, %v1055, 0
        %v1143 = vsel %vm1027, %v1058, 0
        %v1146 = vsel %vm1027, %v1059, 0
        %1148 = vmatprep.subr.mxu0 0.0
        %1149 = vmatpush1.xpose.msra.mxu0 %v1143
        %1150 = vmatprep.subr.mxu0 0.0
        %1151 = vmatpush1.xpose.msra.mxu0 %v1146
        %1152 = vmatprep.subr.mxu0 0.0
        %1153 = vmatpush1.xpose.msra.mxu0 0.0
        %1154 = vmatprep.subr.mxu0 0.0
        %1155 = vmatpush1.xpose.msra.mxu0 0.0
        %1156 = vmatprep.subr.mxu0 0.0
        %1157 = vmatpush1.xpose.msra.mxu0 0.0
        %1158 = vmatprep.subr.mxu0 0.0
        %1159 = vmatpush1.xpose.msra.mxu0 0.0
        %1160 = vmatprep.subr.mxu0 0.0
        %1161 = vmatpush1.xpose.msra.mxu0 0.0
        %1162 = vmatprep.subr.mxu0 0.0
        %1163 = vmatpush1.xpose.msra.mxu0 0.0
        %1164 = vmatprep.subr.mxu0 0.0
        %1165 = vmatpush1.xpose.msra.mxu0 0.0
        %1166 = vmatprep.subr.mxu0 0.0
        %1167 = vmatpush1.xpose.msra.mxu0 0.0
        %1168 = vmatprep.subr.mxu0 0.0
        %1169 = vmatpush1.xpose.msra.mxu0 0.0
        %1170 = vmatprep.subr.mxu0 0.0
        %1171 = vmatpush1.xpose.msra.mxu0 0.0
        %1172 = vmatprep.subr.mxu0 0.0
        %1173 = vmatpush1.xpose.msra.mxu0 0.0
        %1174 = vmatprep.subr.mxu0 0.0
        %1175 = vmatpush1.xpose.msra.mxu0 0.0
        %1176 = vmatprep.subr.mxu0 0.0
        %1177 = vmatpush1.xpose.msra.mxu0 0.0
        %1178 = vmatprep.subr.mxu0 0.0
        %1179 = vmatpush1.xpose.msra.mxu0 0.0
        %1180 = vmatprep.subr.mxu0 0.0
        %1181 = vmatpush1.xpose.msra.mxu0 0.0
        %1182 = vmatprep.subr.mxu0 0.0
        %1183 = vmatpush1.xpose.msra.mxu0 0.0
        %1184 = vmatprep.subr.mxu0 0.0
        %1185 = vmatpush1.xpose.msra.mxu0 0.0
        %1186 = vmatprep.subr.mxu0 0.0
        %1187 = vmatpush1.xpose.msra.mxu0 0.0
        %1188 = vmatprep.subr.mxu0 0.0
        %1189 = vmatpush1.xpose.msra.mxu0 0.0
        %1190 = vmatprep.subr.mxu0 0.0
        %1191 = vmatpush1.xpose.msra.mxu0 0.0
        %1192 = vmatprep.subr.mxu0 0.0
        %1193 = vmatpush1.xpose.msra.mxu0 0.0
        %1194 = vmatprep.subr.mxu0 0.0
        %1195 = vmatpush1.xpose.msra.mxu0 0.0
        %1196 = vmatprep.subr.mxu0 0.0
        %1197 = vmatpush1.xpose.msra.mxu0 0.0
        %1198 = vmatprep.subr.mxu0 0.0
        %1199 = vmatpush1.xpose.msra.mxu0 0.0
        %1200 = vmatprep.subr.mxu0 0.0
        %1201 = vmatpush1.xpose.msra.mxu0 0.0
        %1202 = vmatprep.subr.mxu0 0.0
        %1203 = vmatpush1.xpose.msra.mxu0 0.0
        %1204 = vmatprep.subr.mxu0 0.0
        %1205 = vmatpush1.xpose.msra.mxu0 0.0
        %1206 = vmatprep.subr.mxu0 0.0
        %1207 = vmatpush1.xpose.msra.mxu0 0.0
        %1208 = vmatprep.subr.mxu0 0.0
        %1209 = vmatpush1.xpose.msra.mxu0 0.0
        %1210 = vmatprep.subr.mxu0 0.0
        %1211 = vmatpush1.xpose.msra.mxu0 0.0
        %1212 = vmatprep.mubr.f32.mxu0 0.0
        %1213 = vmatmul.mubr.f32.gmra.mrb[0].mxu0 %v1140
        %v1214 = vpop.f32.mrb[0].mxu0
        %v1215 = vadd.f32 0.0, %v1214
        %v1216 = vpop.f32.mrb[0].mxu0
        %1217 = vdwg.mxu0
        %v1218 = vld [vmem:[%s387] sm:$0xff]
        %v1219 = vcombine.high %v1136, 0.0
        %v1221 = vunpack.c.l.s4 1983009808
        %v1222 = vunpack.c.0.s8 %v1221
        %v1223 = vlaneseq
        %v1224 = vshrl.u32 %v1223, 7
        %v1225 = vsub.s32 %v1222, %v1224
        %v1226 = vrot.slane %v1136, %v1225
        %v1228 = vunpack.c.l.s4 1983009808
        %v1229 = vunpack.c.0.s8 %v1228
        %v1230 = vlaneseq
        %v1231 = vshrl.u32 %v1230, 7
        %v1232 = vsub.s32 %v1229, %v1231
        %v1233 = vrot.slane %v1219, %v1232
        %v1234 = vcombine.high %v1215, 0.0
        %v1236 = vunpack.c.l.s4 1983009808
        %v1237 = vunpack.c.0.s8 %v1236
        %v1238 = vlaneseq
        %v1239 = vshrl.u32 %v1238, 7
        %v1240 = vsub.s32 %v1237, %v1239
        %v1241 = vrot.slane %v1215, %v1240
        %v1243 = vunpack.c.l.s4 1983009808
        %v1244 = vunpack.c.0.s8 %v1243
        %v1245 = vlaneseq
        %v1246 = vshrl.u32 %v1245, 7
        %v1247 = vsub.s32 %v1244, %v1246
        %v1248 = vrot.slane %v1234, %v1247
        %v1249 = vcombine.low %v1226, %v1241
        %v1250 = vcombine.high %v1226, %v1241
        %v1252 = vunpack.c.l.s4 1934713408
        %v1253 = vunpack.c.0.s8 %v1252
        %v1254 = vlaneseq
        %v1255 = vshrl.u32 %v1254, 7
        %v1256 = vsub.s32 %v1253, %v1255
        %v1257 = vrot.slane %v1249, %v1256
        %v1259 = vunpack.c.l.s4 1934713408
        %v1260 = vunpack.c.0.s8 %v1259
        %v1261 = vlaneseq
        %v1262 = vshrl.u32 %v1261, 7
        %v1263 = vsub.s32 %v1260, %v1262
        %v1264 = vrot.slane %v1250, %v1263
        %v1265 = vcombine.low %v1233, %v1248
        %v1266 = vcombine.high %v1233, %v1248
        %v1268 = vunpack.c.l.s4 1934713408
        %v1269 = vunpack.c.0.s8 %v1268
        %v1270 = vlaneseq
        %v1271 = vshrl.u32 %v1270, 7
        %v1272 = vsub.s32 %v1269, %v1271
        %v1273 = vrot.slane %v1265, %v1272
        %v1275 = vunpack.c.l.s4 1934713408
        %v1276 = vunpack.c.0.s8 %v1275
        %v1277 = vlaneseq
        %v1278 = vshrl.u32 %v1277, 7
        %v1279 = vsub.s32 %v1276, %v1278
        %v1280 = vrot.slane %v1266, %v1279
        %v1281 = vcombine.high %v1257, 0.0
        %v1282 = vcombine.high %v1264, 0.0
        %v1283 = vcombine.high %v1273, 0.0
        %v1284 = vcombine.high %v1280, 0.0
        %v1285 = vcombine.low %v1257, %v1264
        %v1287 = vunpack.c.l.s4 1983009808
        %v1288 = vunpack.c.0.s8 %v1287
        %v1289 = vlaneseq
        %v1290 = vshrl.u32 %v1289, 7
        %v1291 = vsub.s32 %v1288, %v1290
        %v1292 = vrot.slane %v1285, %v1291
        %v1293 = vcombine.low %v1281, %v1282
        %v1295 = vunpack.c.l.s4 1983009808
        %v1296 = vunpack.c.0.s8 %v1295
        %v1297 = vlaneseq
        %v1298 = vshrl.u32 %v1297, 7
        %v1299 = vsub.s32 %v1296, %v1298
        %v1300 = vrot.slane %v1293, %v1299
        %v1301 = vcombine.low %v1273, %v1280
        %v1303 = vunpack.c.l.s4 1983009808
        %v1304 = vunpack.c.0.s8 %v1303
        %v1305 = vlaneseq
        %v1306 = vshrl.u32 %v1305, 7
        %v1307 = vsub.s32 %v1304, %v1306
        %v1308 = vrot.slane %v1301, %v1307
        %v1309 = vcombine.low %v1283, %v1284
        %v1311 = vunpack.c.l.s4 1983009808
        %v1312 = vunpack.c.0.s8 %v1311
        %v1313 = vlaneseq
        %v1314 = vshrl.u32 %v1313, 7
        %v1315 = vsub.s32 %v1312, %v1314
        %v1316 = vrot.slane %v1309, %v1315
        %v1317 = vcombine.low %v1292, %v1300
        %v1319 = vunpack.c.l.s4 1934713408
        %v1320 = vunpack.c.0.s8 %v1319
        %v1321 = vlaneseq
        %v1322 = vshrl.u32 %v1321, 7
        %v1323 = vsub.s32 %v1320, %v1322
        %v1324 = vrot.slane %v1317, %v1323
        %v1325 = vcombine.low %v1308, %v1316
        %v1327 = vunpack.c.l.s4 1934713408
        %v1328 = vunpack.c.0.s8 %v1327
        %v1329 = vlaneseq
        %v1330 = vshrl.u32 %v1329, 7
        %v1331 = vsub.s32 %v1328, %v1330
        %v1332 = vrot.slane %v1325, %v1331
        %v1333 = vcombine.low %v1324, %v1332
        %v1334 = vcombine.high %v1324, %v1332
        %1336 = vrot.lane.b32.xlu0 %v1334, 16
        %v1337 = vpop.permute.xlu0 %1336
        %v1339 = vsel %vm880, %v1333, %v1337
        %1341 = vset.pattern.permute.xlu0 0
        %1342 = vperm.xlu0 %1341, %v1218
        %v1343 = vpop.permute.xlu0 %1342
        %v1345 = vmul.f32 %v1339, %v1343
        %1346 = vst.msk [vmem:[%s365] sm:$0xff] %vm674, %v1345
        %s1347 = sand.u32 %s236, 1
        %s1348 = scalar_lea.sflag [#allocation5], %s1347
        %s1349 = sand.u32 %s236, 1
        %s1350 = smul.addr %s1349, 8
        %s1351 = scalar_lea.vmem [#allocation4], %s1350
        // Predicated region
        $region57: #{tpu_custom_call.1} parent=51 // pred_check
          %p1352 = pneg %p246
        $region58: #{tpu_custom_call.1} parent=51 // pred_check_branch
          %1354 = sbr.rel (%p1352) target = $region60
        $region59: #{tpu_custom_call.1} parent=51 // pred_region
          %s1356 = ssub.s32 128, 128
          %1357 = vsyncadd %s1348, %s1356
          %s1358 = sadd.s32 %s27, %s26
          %s1359 = smul.addr %s1358, 128
          %s1360 = scalar_lea.hbm %s8, %s1359
          %s1362 = sshll.u32 %s1351, 4
          %s1363 = int_to_ptr.vmem [resolvable:$true] %s1362
          %1365 = dma.vmem_to_hbm [thread:$0]  %s1363, 128, %s1360, %s1348
        $region60: #{tpu_custom_call.1} parent=51 // pred_fallthru
          _
      $region52: #{tpu_custom_call.1} parent=5 // pred_fallthru
        _
      %p1366 = scmp.le.s32.totalorder 2, %s17
      // Predicated region
      $region61: #{tpu_custom_call.1} parent=5 // pred_check
        %p1367 = pneg %p1366
      $region62: #{tpu_custom_call.1} parent=5 // pred_check_branch
        %1369 = sbr.rel (%p1367) target = $region64
      $region63: #{tpu_custom_call.1} parent=5 // pred_region
        %s1370 = ssub.s32 %s17, 2
        // Predicated region
        $region65: #{tpu_custom_call.1} parent=63 // pred_check
          %p1371 = pneg %p252
        $region66: #{tpu_custom_call.1} parent=63 // pred_check_branch
          %1373 = sbr.rel (%p1371) target = $region68
        $region67: #{tpu_custom_call.1} parent=63 // pred_region
          %s1374 = sand.u32 %s237, 1
          %s1375 = scalar_lea.sflag [#allocation5], %s1374
          %s1376 = sand.u32 %s237, 1
          %s1377 = smul.addr %s1376, 8
          %s1378 = scalar_lea.vmem [#allocation4], %s1377
          %1379 = dma.done %s1375, 128
        $region68: #{tpu_custom_call.1} parent=63 // pred_fallthru
          _
      $region64: #{tpu_custom_call.1} parent=5 // pred_fallthru
        _
    $region6: #{tpu_custom_call.1} parent=1 // loop_footer
      %s21 = sadd.s32 1, %s17
    $region7: #{tpu_custom_call.1} parent=1 // loop_footer_branch
      %16 = sbr.rel target = $region3
    $region8: #{tpu_custom_call.1} parent=1 // loop_exit
      _
    %1380 = vsyncpa [#allocation5], 1
    %s1381 = scalar_lea.sflag [#allocation5], 1
    %1382 = vsyncpa %s1381, 1

// kernel: tpu_custom_call.1
$region0: #{tpu_custom_call.1}
  #allocation0 [shape = 'u32[]', space=smem, size = 0x4, offset = 0x4, fixed_abs, tag = 'smem constant byte address 0x4 - core index']
  #allocation1 [shape = 'u32[144,128]{1,0:T(1,128)}', space=vmem, size = 0x12000, scoped, tag = 'internal scratch']
  #allocation2 [shape = 'f32[2,16,8]{2,1,0:T(8,128)}', space=vmem, size = 0x4000, scoped, tag = 'scratch operand']
  #allocation3 [shape = 'f32[2,16,8]{2,1,0:T(8,128)}', space=vmem, size = 0x4000, scoped, tag = 'scratch operand']
  %s0 = inlined_call_operand.vmem [shape: f32[2,8,32], index: 0, kind: input, shape index: {}]
  %s1 = inlined_call_operand.vmem [shape: f32[2,2,32,8], index: 1, kind: input, shape index: {}]
  %s2 = inlined_call_operand.vmem [shape: f32[32,32], index: 2, kind: input, shape index: {}]
  %s3 = inlined_call_operand.vmem [shape: f32[1,32], index: 3, kind: input, shape index: {}]
  %s4 = inlined_call_operand.vmem [shape: f32[2,32,32], index: 4, kind: input, shape index: {}]
  %s5 = inlined_call_operand.vmem [shape: f32[2,32,1], index: 5, kind: input, shape index: {}]
  %s6 = inlined_call_operand.vmem [shape: f32[2,1,8], index: 6, kind: input, shape index: {}]
  %s7 = inlined_call_operand.vmem [shape: f32[2,8,1], index: 7, kind: input, shape index: {}]
  %s8 = inlined_call_operand.hbm [shape: f32[2,8,32], index: 8, kind: output, shape index: {}]
  %s9 = sld [smem:[#allocation0]]
  $region69: #{tpu_custom_call.1} parent=0
    _
  %s11 = ssub.s32 1, %s9
  %s12 = scalar_select 0, %s11, %s9
  $region1: #{tpu_custom_call.1} parent=0
    #allocation4 [shape = 'u8[8192]{0}', space=vmem, size = 0x2000, scoped, tag = 'output window, operand 0']
    #allocation5 [shape = 's32[2]{0}', space=sflag, size = 0x8, scoped, tag = 'scoped memory for tpu_custom_call.1']
    %13 = vsyncpa [#allocation5], 0
    %s14 = scalar_lea.sflag [#allocation5], 1
    %15 = vsyncpa %s14, 0
    loop: start=0, step=1, limit=4
    $region2: #{tpu_custom_call.1} parent=1 // loop_pre_header
      _
    $region3: #{tpu_custom_call.1} parent=1 // loop_header
      %s17 = sphi 0, %s21
      %p18 = scmp.ge.s32.totalorder %s17, 4
      %s24 = sphi 0, %s36
      %s25 = sphi 0, %s32
      %s26 = sphi 0, %s24
      %s27 = sphi 0, %s25
      %s28 = sphi 0, %s26
      %s29 = sphi 0, %s27
      %s41 = sphi 0, %s43
      %s44 = sphi 0, %s41
      %s45 = sphi 0, %s44
      %s61 = sphi 0, %s45
      %s67 = sphi 0, %s69
      %s70 = sphi 0, %s67
      %s71 = sphi 0, %s70
      %s87 = sphi 0, %s71
      %s91 = sphi 0, %s91
      %s93 = sphi 0, %s91
      %s94 = sphi 0, %s93
      %s108 = sphi 0, %s94
      %s112 = sphi 0, %s112
      %s114 = sphi 0, %s112
      %s115 = sphi 0, %s114
      %s129 = sphi 0, %s115
      %s133 = sphi 0, %s133
      %s135 = sphi 0, %s133
      %s136 = sphi 0, %s135
      %s150 = sphi 0, %s136
      %s154 = sphi 0, %s154
      %s156 = sphi 0, %s154
      %s157 = sphi 0, %s156
      %s171 = sphi 0, %s157
      %s177 = sphi 0, %s179
      %s180 = sphi 0, %s177
      %s181 = sphi 0, %s180
      %s197 = sphi 0, %s181
      %s205 = sphi 0, %s207
      %s208 = sphi 0, %s205
      %s209 = sphi 0, %s208
      %s225 = sphi 0, %s209
      %s233 = sphi 0, %s235
      %s236 = sphi 0, %s233
      %s237 = sphi 0, %s236
      %s253 = sphi 0, %s237
    $region4: #{tpu_custom_call.1} parent=1 // loop_header_branch
      %20 = sbr.rel (%p18) target = $region8
    $region5: #{tpu_custom_call.1} parent=1 // loop_body
      %s22 = ssub.s32 %s17, 1
      %s23 = ssub.s32 %s17, 2
      %s30 = sadd.s32 1, %s25
      %p31 = scmp.ge.s32.totalorder %s30, 1
      %s32 = scalar_select %p31, 0, %s30
      %s33 = sadd.s32 1, %s24
      %s34 = scalar_select %p31, %s33, %s24
      %p35 = scmp.ge.s32.totalorder %s34, 2
      %s36 = scalar_select %p35, 0, %s34
      %s37 = ssub.s32 %s24, %s36
      %s38 = ssub.s32 %s25, %s32
      %s39 = sor.u32 %s37, %s38
      %p40 = scmp.eq.s32.totalorder %s39, 0
      %s42 = sadd.s32 %s41, 1
      %s43 = scalar_select %p40, %s41, %s42
      %p46 = pneg %p40
      %p47 = scmp.eq.s32.totalorder %s17, 1
      %p48 = por %p46, %p47
      %p49 = scmp.ne.s32.totalorder %s41, %s44
      %p50 = scmp.eq.s32.totalorder %s17, 0
      %p51 = por %p49, %p50
      %p52 = scmp.ne.s32.totalorder %s41, %s44
      %p53 = scmp.eq.s32.totalorder %s22, 1
      %p54 = por %p52, %p53
      %p55 = scmp.ne.s32.totalorder %s44, %s45
      %p56 = scmp.eq.s32.totalorder %s22, 0
      %p57 = por %p55, %p56
      %p58 = scmp.ne.s32.totalorder %s44, %s45
      %p59 = scmp.eq.s32.totalorder %s23, 1
      %p60 = por %p58, %p59
      %p62 = scmp.ne.s32.totalorder %s45, %s61
      %p63 = scmp.eq.s32.totalorder %s23, 0
      %p64 = por %p62, %p63
      %s65 = ssub.s32 %s24, %s36
      %p66 = scmp.eq.s32.totalorder %s65, 0
      %s68 = sadd.s32 %s67, 1
      %s69 = scalar_select %p66, %s67, %s68
      %p72 = pneg %p66
      %p73 = scmp.eq.s32.totalorder %s17, 1
      %p74 = por %p72, %p73
      %p75 = scmp.ne.s32.totalorder %s67, %s70
      %p76 = scmp.eq.s32.totalorder %s17, 0
      %p77 = por %p75, %p76
      %p78 = scmp.ne.s32.totalorder %s67, %s70
      %p79 = scmp.eq.s32.totalorder %s22, 1
      %p80 = por %p78, %p79
      %p81 = scmp.ne.s32.totalorder %s70, %s71
      %p82 = scmp.eq.s32.totalorder %s22, 0
      %p83 = por %p81, %p82
      %p84 = scmp.ne.s32.totalorder %s70, %s71
      %p85 = scmp.eq.s32.totalorder %s23, 1
      %p86 = por %p84, %p85
      %p88 = scmp.ne.s32.totalorder %s71, %s87
      %p89 = scmp.eq.s32.totalorder %s23, 0
      %p90 = por %p88, %p89
      %s92 = sadd.s32 %s91, 1
      %p95 = scmp.eq.s32.totalorder %s17, 1
      %p96 = scmp.ne.s32.totalorder %s91, %s93
      %p97 = scmp.eq.s32.totalorder %s17, 0
      %p98 = por %p96, %p97
      %p99 = scmp.ne.s32.totalorder %s91, %s93
      %p100 = scmp.eq.s32.totalorder %s22, 1
      %p101 = por %p99, %p100
      %p102 = scmp.ne.s32.totalorder %s93, %s94
      %p103 = scmp.eq.s32.totalorder %s22, 0
      %p104 = por %p102, %p103
      %p105 = scmp.ne.s32.totalorder %s93, %s94
      %p106 = scmp.eq.s32.totalorder %s23, 1
      %p107 = por %p105, %p106
      %p109 = scmp.ne.s32.totalorder %s94, %s108
      %p110 = scmp.eq.s32.totalorder %s23, 0
      %p111 = por %p109, %p110
      %s113 = sadd.s32 %s112, 1
      %p116 = scmp.eq.s32.totalorder %s17, 1
      %p117 = scmp.ne.s32.totalorder %s112, %s114
      %p118 = scmp.eq.s32.totalorder %s17, 0
      %p119 = por %p117, %p118
      %p120 = scmp.ne.s32.totalorder %s112, %s114
      %p121 = scmp.eq.s32.totalorder %s22, 1
      %p122 = por %p120, %p121
      %p123 = scmp.ne.s32.totalorder %s114, %s115
      %p124 = scmp.eq.s32.totalorder %s22, 0
      %p125 = por %p123, %p124
      %p126 = scmp.ne.s32.totalorder %s114, %s115
      %p127 = scmp.eq.s32.totalorder %s23, 1
      %p128 = por %p126, %p127
      %p130 = scmp.ne.s32.totalorder %s115, %s129
      %p131 = scmp.eq.s32.totalorder %s23, 0
      %p132 = por %p130, %p131
      %s134 = sadd.s32 %s133, 1
      %p137 = scmp.eq.s32.totalorder %s17, 1
      %p138 = scmp.ne.s32.totalorder %s133, %s135
      %p139 = scmp.eq.s32.totalorder %s17, 0
      %p140 = por %p138, %p139
      %p141 = scmp.ne.s32.totalorder %s133, %s135
      %p142 = scmp.eq.s32.totalorder %s22, 1
      %p143 = por %p141, %p142
      %p144 = scmp.ne.s32.totalorder %s135, %s136
      %p145 = scmp.eq.s32.totalorder %s22, 0
      %p146 = por %p144, %p145
      %p147 = scmp.ne.s32.totalorder %s135, %s136
      %p148 = scmp.eq.s32.totalorder %s23, 1
      %p149 = por %p147, %p148
      %p151 = scmp.ne.s32.totalorder %s136, %s150
      %p152 = scmp.eq.s32.totalorder %s23, 0
      %p153 = por %p151, %p152
      %s155 = sadd.s32 %s154, 1
      %p158 = scmp.eq.s32.totalorder %s17, 1
      %p159 = scmp.ne.s32.totalorder %s154, %s156
      %p160 = scmp.eq.s32.totalorder %s17, 0
      %p161 = por %p159, %p160
      %p162 = scmp.ne.s32.totalorder %s154, %s156
      %p163 = scmp.eq.s32.totalorder %s22, 1
      %p164 = por %p162, %p163
      %p165 = scmp.ne.s32.totalorder %s156, %s157
      %p166 = scmp.eq.s32.totalorder %s22, 0
      %p167 = por %p165, %p166
      %p168 = scmp.ne.s32.totalorder %s156, %s157
      %p169 = scmp.eq.s32.totalorder %s23, 1
      %p170 = por %p168, %p169
      %p172 = scmp.ne.s32.totalorder %s157, %s171
      %p173 = scmp.eq.s32.totalorder %s23, 0
      %p174 = por %p172, %p173
      %s175 = ssub.s32 %s24, %s36
      %p176 = scmp.eq.s32.totalorder %s175, 0
      %s178 = sadd.s32 %s177, 1
      %s179 = scalar_select %p176, %s177, %s178
      %p182 = pneg %p176
      %p183 = scmp.eq.s32.totalorder %s17, 1
      %p184 = por %p182, %p183
      %p185 = scmp.ne.s32.totalorder %s177, %s180
      %p186 = scmp.eq.s32.totalorder %s17, 0
      %p187 = por %p185, %p186
      %p188 = scmp.ne.s32.totalorder %s177, %s180
      %p189 = scmp.eq.s32.totalorder %s22, 1
      %p190 = por %p188, %p189
      %p191 = scmp.ne.s32.totalorder %s180, %s181
      %p192 = scmp.eq.s32.totalorder %s22, 0
      %p193 = por %p191, %p192
      %p194 = scmp.ne.s32.totalorder %s180, %s181
      %p195 = scmp.eq.s32.totalorder %s23, 1
      %p196 = por %p194, %p195
      %p198 = scmp.ne.s32.totalorder %s181, %s197
      %p199 = scmp.eq.s32.totalorder %s23, 0
      %p200 = por %p198, %p199
      %s201 = ssub.s32 %s24, %s36
      %s202 = ssub.s32 %s25, %s32
      %s203 = sor.u32 %s201, %s202
      %p204 = scmp.eq.s32.totalorder %s203, 0
      %s206 = sadd.s32 %s205, 1
      %s207 = scalar_select %p204, %s205, %s206
      %p210 = pneg %p204
      %p211 = scmp.eq.s32.totalorder %s17, 1
      %p212 = por %p210, %p211
      %p213 = scmp.ne.s32.totalorder %s205, %s208
      %p214 = scmp.eq.s32.totalorder %s17, 0
      %p215 = por %p213, %p214
      %p216 = scmp.ne.s32.totalorder %s205, %s208
      %p217 = scmp.eq.s32.totalorder %s22, 1
      %p218 = por %p216, %p217
      %p219 = scmp.ne.s32.totalorder %s208, %s209
      %p220 = scmp.eq.s32.totalorder %s22, 0
      %p221 = por %p219, %p220
      %p222 = scmp.ne.s32.totalorder %s208, %s209
      %p223 = scmp.eq.s32.totalorder %s23, 1
      %p224 = por %p222, %p223
      %p226 = scmp.ne.s32.totalorder %s209, %s225
      %p227 = scmp.eq.s32.totalorder %s23, 0
      %p228 = por %p226, %p227
      %s229 = ssub.s32 %s24, %s36
      %s230 = ssub.s32 %s25, %s32
      %s231 = sor.u32 %s229, %s230
      %p232 = scmp.eq.s32.totalorder %s231, 0
      %s234 = sadd.s32 %s233, 1
      %s235 = scalar_select %p232, %s233, %s234
      %p238 = pneg %p232
      %p239 = scmp.eq.s32.totalorder %s17, 1
      %p240 = por %p238, %p239
      %p241 = scmp.ne.s32.totalorder %s233, %s236
      %p242 = scmp.eq.s32.totalorder %s17, 0
      %p243 = por %p241, %p242
      %p244 = scmp.ne.s32.totalorder %s233, %s236
      %p245 = scmp.eq.s32.totalorder %s22, 1
      %p246 = por %p244, %p245
      %p247 = scmp.ne.s32.totalorder %s236, %s237
      %p248 = scmp.eq.s32.totalorder %s22, 0
      %p249 = por %p247, %p248
      %p250 = scmp.ne.s32.totalorder %s236, %s237
      %p251 = scmp.eq.s32.totalorder %s23, 1
      %p252 = por %p250, %p251
      %p254 = scmp.ne.s32.totalorder %s237, %s253
      %p255 = scmp.eq.s32.totalorder %s23, 0
      %p256 = por %p254, %p255
      %p257 = scmp.le.s32.totalorder 1, %s17
      %p258 = scmp.lt.s32.totalorder %s17, 3
      %p259 = pnand %p257, %p258
      %p260 = pneg %p259
      // Predicated region
      $region9: #{tpu_custom_call.1} parent=5 // pred_check
        _
      $region10: #{tpu_custom_call.1} parent=5 // pred_check_branch
        %262 = sbr.rel (%p259) target = $region12
      $region11: #{tpu_custom_call.1} parent=5 // pred_region
        %s263 = ssub.s32 %s17, 1
        // Predicated region
        $region13: #{tpu_custom_call.1} parent=11 // pred_check
          %p264 = pneg %p104
        $region14: #{tpu_custom_call.1} parent=11 // pred_check_branch
          %266 = sbr.rel (%p264) target = $region16
        $region15: #{tpu_custom_call.1} parent=11 // pred_region
          _
        $region16: #{tpu_custom_call.1} parent=11 // pred_fallthru
          _
        // Predicated region
        $region17: #{tpu_custom_call.1} parent=11 // pred_check
          %p267 = pneg %p125
        $region18: #{tpu_custom_call.1} parent=11 // pred_check_branch
          %269 = sbr.rel (%p267) target = $region20
        $region19: #{tpu_custom_call.1} parent=11 // pred_region
          _
        $region20: #{tpu_custom_call.1} parent=11 // pred_fallthru
          _
        // Predicated region
        $region21: #{tpu_custom_call.1} parent=11 // pred_check
          %p270 = pneg %p146
        $region22: #{tpu_custom_call.1} parent=11 // pred_check_branch
          %272 = sbr.rel (%p270) target = $region24
        $region23: #{tpu_custom_call.1} parent=11 // pred_region
          _
        $region24: #{tpu_custom_call.1} parent=11 // pred_fallthru
          _
        // Predicated region
        $region25: #{tpu_custom_call.1} parent=11 // pred_check
          %p273 = pneg %p167
        $region26: #{tpu_custom_call.1} parent=11 // pred_check_branch
          %275 = sbr.rel (%p273) target = $region28
        $region27: #{tpu_custom_call.1} parent=11 // pred_region
          _
        $region28: #{tpu_custom_call.1} parent=11 // pred_fallthru
          _
      $region12: #{tpu_custom_call.1} parent=5 // pred_fallthru
        _
      %p276 = scmp.lt.s32.totalorder %s17, 2
      // Predicated region
      $region29: #{tpu_custom_call.1} parent=5 // pred_check
        %p277 = pneg %p276
      $region30: #{tpu_custom_call.1} parent=5 // pred_check_branch
        %279 = sbr.rel (%p277) target = $region32
      $region31: #{tpu_custom_call.1} parent=5 // pred_region
        // Predicated region
        $region33: #{tpu_custom_call.1} parent=31 // pred_check
          %p280 = pneg %p51
        $region34: #{tpu_custom_call.1} parent=31 // pred_check_branch
          %282 = sbr.rel (%p280) target = $region36
        $region35: #{tpu_custom_call.1} parent=31 // pred_region
          %p283 = scmp.lt.s32.totalorder %s24, 1
          %s284 = scalar_select %p283, %s24, 1
          %p285 = scmp.lt.s32.totalorder %s25, 0
          %s286 = scalar_select %p285, %s25, 0
          %s287 = sadd.s32 %s286, %s284
          %s288 = smul.addr %s287, 8
          %s289 = scalar_lea.vmem %s0, %s288
        $region36: #{tpu_custom_call.1} parent=31 // pred_fallthru
          _
        // Predicated region
        $region37: #{tpu_custom_call.1} parent=31 // pred_check
          %p290 = pneg %p77
        $region38: #{tpu_custom_call.1} parent=31 // pred_check_branch
          %292 = sbr.rel (%p290) target = $region40
        $region39: #{tpu_custom_call.1} parent=31 // pred_region
          %p293 = scmp.lt.s32.totalorder %s24, 1
          %s294 = scalar_select %p293, %s24, 1
          %s295 = smul.addr %s294, 8
          %s296 = smul.addr %s295, 8
          %s297 = scalar_lea.vmem %s1, %s296
        $region40: #{tpu_custom_call.1} parent=31 // pred_fallthru
          _
        // Predicated region
        $region41: #{tpu_custom_call.1} parent=31 // pred_check
          %p298 = pneg %p187
        $region42: #{tpu_custom_call.1} parent=31 // pred_check_branch
          %300 = sbr.rel (%p298) target = $region44
        $region43: #{tpu_custom_call.1} parent=31 // pred_region
          %p301 = scmp.lt.s32.totalorder %s24, 1
          %s302 = scalar_select %p301, %s24, 1
          %s303 = scalar_lea.vmem %s6, %s302
        $region44: #{tpu_custom_call.1} parent=31 // pred_fallthru
          _
        // Predicated region
        $region45: #{tpu_custom_call.1} parent=31 // pred_check
          %p304 = pneg %p215
        $region46: #{tpu_custom_call.1} parent=31 // pred_check_branch
          %306 = sbr.rel (%p304) target = $region48
        $region47: #{tpu_custom_call.1} parent=31 // pred_region
          %p307 = scmp.lt.s32.totalorder %s24, 1
          %s308 = scalar_select %p307, %s24, 1
          %p309 = scmp.lt.s32.totalorder %s25, 0
          %s310 = scalar_select %p309, %s25, 0
          %s311 = sadd.s32 %s310, %s308
          %s312 = smul.addr %s311, 8
          %s313 = scalar_lea.vmem %s7, %s312
        $region48: #{tpu_custom_call.1} parent=31 // pred_fallthru
          _
      $region32: #{tpu_custom_call.1} parent=5 // pred_fallthru
        _
      %p314 = scmp.le.s32.totalorder 1, %s17
      %p315 = scmp.lt.s32.totalorder %s17, 3
      %p316 = pnand %p314, %p315
      %p317 = pneg %p316
      // Predicated region
      $region49: #{tpu_custom_call.1} parent=5 // pred_check
        _
      $region50: #{tpu_custom_call.1} parent=5 // pred_check_branch
        %319 = sbr.rel (%p316) target = $region52
      $region51: #{tpu_custom_call.1} parent=5 // pred_region
        %s320 = ssub.s32 %s17, 1
        %p321 = scmp.lt.s32.totalorder %s26, 1
        %s322 = scalar_select %p321, %s26, 1
        %p323 = scmp.lt.s32.totalorder %s27, 0
        %s324 = scalar_select %p323, %s27, 0
        %s325 = sadd.s32 %s324, %s322
        %s326 = smul.addr %s325, 8
        %s327 = scalar_lea.vmem %s0, %s326
        %p328 = pneg %p57
        %p329 = pneg %p54
        %p330 = scmp.lt.s32.totalorder %s26, 1
        %s331 = scalar_select %p330, %s26, 1
        %s332 = smul.addr %s331, 8
        %s333 = smul.addr %s332, 8
        %s334 = scalar_lea.vmem %s1, %s333
        %p335 = pneg %p83
        %p336 = pneg %p80
        %p337 = pneg %p104
        %p338 = pneg %p101
        %p339 = pneg %p125
        %p340 = pneg %p122
        %p341 = pneg %p146
        %p342 = pneg %p143
        %p343 = pneg %p167
        %p344 = pneg %p164
        %p345 = scmp.lt.s32.totalorder %s26, 1
        %s346 = scalar_select %p345, %s26, 1
        %s347 = scalar_lea.vmem %s6, %s346
        %p348 = pneg %p193
        %p349 = pneg %p190
        %p350 = scmp.lt.s32.totalorder %s26, 1
        %s351 = scalar_select %p350, %s26, 1
        %p352 = scmp.lt.s32.totalorder %s27, 0
        %s353 = scalar_select %p352, %s27, 0
        %s354 = sadd.s32 %s353, %s351
        %s355 = smul.addr %s354, 8
        %s356 = scalar_lea.vmem %s7, %s355
        %p357 = pneg %p221
        %p358 = pneg %p218
        %p359 = pneg %p249
        %p360 = pneg %p246
        %s361 = sand.u32 %s236, 1
        %s362 = scalar_lea.sflag [#allocation5], %s361
        %s363 = sand.u32 %s236, 1
        %s364 = smul.addr %s363, 8
        %s365 = scalar_lea.vmem [#allocation4], %s364
        %p366 = scmp.lt.s32.totalorder %s26, 1
        %s367 = scalar_select %p366, %s26, 1
        %p368 = scmp.lt.s32.totalorder %s27, 0
        %s369 = scalar_select %p368, %s27, 0
        %s370 = sadd.s32 %s369, %s367
        %s371 = smul.addr %s370, 8
        %s372 = scalar_lea.vmem %s0, %s371
        %p373 = scmp.lt.s32.totalorder %s26, 1
        %s374 = scalar_select %p373, %s26, 1
        %s375 = smul.addr %s374, 8
        %s376 = smul.addr %s375, 8
        %s377 = scalar_lea.vmem %s1, %s376
        %p378 = scmp.lt.s32.totalorder %s26, 1
        %s379 = scalar_select %p378, %s26, 1
        %s380 = scalar_lea.vmem %s6, %s379
        %p381 = scmp.lt.s32.totalorder %s26, 1
        %s382 = scalar_select %p381, %s26, 1
        %p383 = scmp.lt.s32.totalorder %s27, 0
        %s384 = scalar_select %p383, %s27, 0
        %s385 = sadd.s32 %s384, %s382
        %s386 = smul.addr %s385, 8
        %s387 = scalar_lea.vmem %s7, %s386
        %p388 = scmp.eq.s32.totalorder %s27, 0
        // Predicated region
        $region53: #{tpu_custom_call.1} parent=51 // pred_check
          %p389 = pneg %p388
        $region54: #{tpu_custom_call.1} parent=51 // pred_check_branch
          %391 = sbr.rel (%p389) target = $region56
        $region55: #{tpu_custom_call.1} parent=51 // pred_region
          %v392 = vld [vmem:[%s377] sm:$0xff]
          %v393 = vld [vmem:[%s377 + $0x8] sm:$0xff]
          %v394 = vld [vmem:[%s377 + $0x10] sm:$0xff]
          %v395 = vld [vmem:[%s377 + $0x18] sm:$0xff]
          %v396 = vld [vmem:[%s377 + $0x20] sm:$0xff]
          %v397 = vld [vmem:[%s377 + $0x28] sm:$0xff]
          %v398 = vld [vmem:[%s377 + $0x30] sm:$0xff]
          %v399 = vld [vmem:[%s377 + $0x38] sm:$0xff]
          %v400 = vld [vmem:[%s4] sm:$0xff]
          %v401 = vld [vmem:[%s4 + $0x8] sm:$0xff]
          %v402 = vld [vmem:[%s4 + $0x10] sm:$0xff]
          %v403 = vld [vmem:[%s4 + $0x18] sm:$0xff]
          %v404 = vld [vmem:[%s4 + $0x20] sm:$0xff]
          %v405 = vld [vmem:[%s4 + $0x28] sm:$0xff]
          %v406 = vld [vmem:[%s4 + $0x30] sm:$0xff]
          %v407 = vld [vmem:[%s4 + $0x38] sm:$0xff]
          %v408 = vld [vmem:[%s5] sm:$0xff]
          %v409 = vld [vmem:[%s5 + $0x8] sm:$0xff]
          %v410 = vld [vmem:[%s5 + $0x10] sm:$0xff]
          %v411 = vld [vmem:[%s5 + $0x18] sm:$0xff]
          %v412 = vld [vmem:[%s5 + $0x20] sm:$0xff]
          %v413 = vld [vmem:[%s5 + $0x28] sm:$0xff]
          %v414 = vld [vmem:[%s5 + $0x30] sm:$0xff]
          %v415 = vld [vmem:[%s5 + $0x38] sm:$0xff]
          %417 = vset.pattern.permute.xlu0 0
          %418 = vperm.xlu0 %417, %v408
          %v419 = vpop.permute.xlu0 %418
          %422 = vset.pattern.permute.xlu0 0
          %423 = vperm.xlu0 %422, %v409
          %v424 = vpop.permute.xlu0 %423
          %427 = vset.pattern.permute.xlu0 0
          %428 = vperm.xlu0 %427, %v410
          %v429 = vpop.permute.xlu0 %428
          %432 = vset.pattern.permute.xlu0 0
          %433 = vperm.xlu0 %432, %v411
          %v434 = vpop.permute.xlu0 %433
          %437 = vset.pattern.permute.xlu0 0
          %438 = vperm.xlu0 %437, %v412
          %v439 = vpop.permute.xlu0 %438
          %442 = vset.pattern.permute.xlu0 0
          %443 = vperm.xlu0 %442, %v413
          %v444 = vpop.permute.xlu0 %443
          %447 = vset.pattern.permute.xlu0 0
          %448 = vperm.xlu0 %447, %v414
          %v449 = vpop.permute.xlu0 %448
          %452 = vset.pattern.permute.xlu0 0
          %453 = vperm.xlu0 %452, %v415
          %v454 = vpop.permute.xlu0 %453
          %vm456 = vcmask 261120
          %v458 = vsel %vm456, %v400, 0
          %v461 = vsel %vm456, %v401, 0
          %v464 = vsel %vm456, %v402, 0
          %v467 = vsel %vm456, %v403, 0
          %469 = vmatprep.subr.mxu0 0.0
          %470 = vmatpush1.msra.mxu0 %v392
          %471 = vmatprep.subr.mxu0 0.0
          %472 = vmatpush1.msra.mxu0 %v393
          %473 = vmatprep.subr.mxu0 0.0
          %474 = vmatpush1.msra.mxu0 %v394
          %475 = vmatprep.subr.mxu0 0.0
          %476 = vmatpush1.msra.mxu0 %v395
          %477 = vmatprep.subr.mxu0 0.0
          %478 = vmatpush1.msra.mxu0 0.0
          %479 = vmatprep.subr.mxu0 0.0
          %480 = vmatpush1.msra.mxu0 0.0
          %481 = vmatprep.subr.mxu0 0.0
          %482 = vmatpush1.msra.mxu0 0.0
          %483 = vmatprep.subr.mxu0 0.0
          %484 = vmatpush1.msra.mxu0 0.0
          %485 = vmatprep.subr.mxu0 0.0
          %486 = vmatpush1.msra.mxu0 0.0
          %487 = vmatprep.subr.mxu0 0.0
          %488 = vmatpush1.msra.mxu0 0.0
          %489 = vmatprep.subr.mxu0 0.0
          %490 = vmatpush1.msra.mxu0 0.0
          %491 = vmatprep.subr.mxu0 0.0
          %492 = vmatpush1.msra.mxu0 0.0
          %493 = vmatprep.subr.mxu0 0.0
          %494 = vmatpush1.msra.mxu0 0.0
          %495 = vmatprep.subr.mxu0 0.0
          %496 = vmatpush1.msra.mxu0 0.0
          %497 = vmatprep.subr.mxu0 0.0
          %498 = vmatpush1.msra.mxu0 0.0
          %499 = vmatprep.subr.mxu0 0.0
          %500 = vmatpush1.msra.mxu0 0.0
          %501 = vmatprep.subr.mxu0 0.0
          %502 = vmatpush1.msra.mxu0 0.0
          %503 = vmatprep.subr.mxu0 0.0
          %504 = vmatpush1.msra.mxu0 0.0
          %505 = vmatprep.subr.mxu0 0.0
          %506 = vmatpush1.msra.mxu0 0.0
          %507 = vmatprep.subr.mxu0 0.0
          %508 = vmatpush1.msra.mxu0 0.0
          %509 = vmatprep.subr.mxu0 0.0
          %510 = vmatpush1.msra.mxu0 0.0
          %511 = vmatprep.subr.mxu0 0.0
          %512 = vmatpush1.msra.mxu0 0.0
          %513 = vmatprep.subr.mxu0 0.0
          %514 = vmatpush1.msra.mxu0 0.0
          %515 = vmatprep.subr.mxu0 0.0
          %516 = vmatpush1.msra.mxu0 0.0
          %517 = vmatprep.subr.mxu0 0.0
          %518 = vmatpush1.msra.mxu0 0.0
          %519 = vmatprep.subr.mxu0 0.0
          %520 = vmatpush1.msra.mxu0 0.0
          %521 = vmatprep.subr.mxu0 0.0
          %522 = vmatpush1.msra.mxu0 0.0
          %523 = vmatprep.subr.mxu0 0.0
          %524 = vmatpush1.msra.mxu0 0.0
          %525 = vmatprep.subr.mxu0 0.0
          %526 = vmatpush1.msra.mxu0 0.0
          %527 = vmatprep.subr.mxu0 0.0
          %528 = vmatpush1.msra.mxu0 0.0
          %529 = vmatprep.subr.mxu0 0.0
          %530 = vmatpush1.msra.mxu0 0.0
          %531 = vmatprep.subr.mxu0 0.0
          %532 = vmatpush1.msra.mxu0 0.0
          %533 = vmatprep.mubr.f32.mxu0 0.0
          %534 = vmatmul.mubr.f32.gmra.mrb[0].mxu0 %v458
          %v535 = vpop.f32.mrb[0].mxu0
          %v536 = vadd.f32 %v419, %v535
          %v537 = vpop.f32.mrb[0].mxu0
          %538 = vmatprep.mubr.f32.mxu0 0.0
          %539 = vmatmul.mubr.f32.gmra.mrb[0].mxu0 %v461
          %v540 = vpop.f32.mrb[0].mxu0
          %v541 = vadd.f32 %v424, %v540
          %v542 = vpop.f32.mrb[0].mxu0
          %543 = vmatprep.mubr.f32.mxu0 0.0
          %544 = vmatmul.mubr.f32.gmra.mrb[0].mxu0 %v464
          %v545 = vpop.f32.mrb[0].mxu0
          %v546 = vadd.f32 %v429, %v545
          %v547 = vpop.f32.mrb[0].mxu0
          %548 = vmatprep.mubr.f32.mxu0 0.0
          %549 = vmatmul.mubr.f32.gmra.mrb[0].mxu0 %v467
          %v550 = vpop.f32.mrb[0].mxu0
          %v551 = vadd.f32 %v434, %v550
          %v552 = vpop.f32.mrb[0].mxu0
          %553 = vdwg.mxu0
          %v555 = vsel %vm456, %v404, 0
          %v558 = vsel %vm456, %v405, 0
          %v561 = vsel %vm456, %v406, 0
          %v564 = vsel %vm456, %v407, 0
          %566 = vmatprep.subr.mxu0 0.0
          %567 = vmatpush1.msra.mxu0 %v396
          %568 = vmatprep.subr.mxu0 0.0
          %569 = vmatpush1.msra.mxu0 %v397
          %570 = vmatprep.subr.mxu0 0.0
          %571 = vmatpush1.msra.mxu0 %v398
          %572 = vmatprep.subr.mxu0 0.0
          %573 = vmatpush1.msra.mxu0 %v399
          %574 = vmatprep.subr.mxu0 0.0
          %575 = vmatpush1.msra.mxu0 0.0
          %576 = vmatprep.subr.mxu0 0.0
          %577 = vmatpush1.msra.mxu0 0.0
          %578 = vmatprep.subr.mxu0 0.0
          %579 = vmatpush1.msra.mxu0 0.0
          %580 = vmatprep.subr.mxu0 0.0
          %581 = vmatpush1.msra.mxu0 0.0
          %582 = vmatprep.subr.mxu0 0.0
          %583 = vmatpush1.msra.mxu0 0.0
          %584 = vmatprep.subr.mxu0 0.0
          %585 = vmatpush1.msra.mxu0 0.0
          %586 = vmatprep.subr.mxu0 0.0
          %587 = vmatpush1.msra.mxu0 0.0
          %588 = vmatprep.subr.mxu0 0.0
          %589 = vmatpush1.msra.mxu0 0.0
          %590 = vmatprep.subr.mxu0 0.0
          %591 = vmatpush1.msra.mxu0 0.0
          %592 = vmatprep.subr.mxu0 0.0
          %593 = vmatpush1.msra.mxu0 0.0
          %594 = vmatprep.subr.mxu0 0.0
          %595 = vmatpush1.msra.mxu0 0.0
          %596 = vmatprep.subr.mxu0 0.0
          %597 = vmatpush1.msra.mxu0 0.0
          %598 = vmatprep.subr.mxu0 0.0
          %599 = vmatpush1.msra.mxu0 0.0
          %600 = vmatprep.subr.mxu0 0.0
          %601 = vmatpush1.msra.mxu0 0.0
          %602 = vmatprep.subr.mxu0 0.0
          %603 = vmatpush1.msra.mxu0 0.0
          %604 = vmatprep.subr.mxu0 0.0
          %605 = vmatpush1.msra.mxu0 0.0
          %606 = vmatprep.subr.mxu0 0.0
          %607 = vmatpush1.msra.mxu0 0.0
          %608 = vmatprep.subr.mxu0 0.0
          %609 = vmatpush1.msra.mxu0 0.0
          %610 = vmatprep.subr.mxu0 0.0
          %611 = vmatpush1.msra.mxu0 0.0
          %612 = vmatprep.subr.mxu0 0.0
          %613 = vmatpush1.msra.mxu0 0.0
          %614 = vmatprep.subr.mxu0 0.0
          %615 = vmatpush1.msra.mxu0 0.0
          %616 = vmatprep.subr.mxu0 0.0
          %617 = vmatpush1.msra.mxu0 0.0
          %618 = vmatprep.subr.mxu0 0.0
          %619 = vmatpush1.msra.mxu0 0.0
          %620 = vmatprep.subr.mxu0 0.0
          %621 = vmatpush1.msra.mxu0 0.0
          %622 = vmatprep.subr.mxu0 0.0
          %623 = vmatpush1.msra.mxu0 0.0
          %624 = vmatprep.subr.mxu0 0.0
          %625 = vmatpush1.msra.mxu0 0.0
          %626 = vmatprep.subr.mxu0 0.0
          %627 = vmatpush1.msra.mxu0 0.0
          %628 = vmatprep.subr.mxu0 0.0
          %629 = vmatpush1.msra.mxu0 0.0
          %630 = vmatprep.mubr.f32.mxu0 0.0
          %631 = vmatmul.mubr.f32.gmra.mrb[0].mxu0 %v555
          %v632 = vpop.f32.mrb[0].mxu0
          %v633 = vadd.f32 %v439, %v632
          %v634 = vpop.f32.mrb[0].mxu0
          %635 = vmatprep.mubr.f32.mxu0 0.0
          %636 = vmatmul.mubr.f32.gmra.mrb[0].mxu0 %v558
          %v637 = vpop.f32.mrb[0].mxu0
          %v638 = vadd.f32 %v444, %v637
          %v639 = vpop.f32.mrb[0].mxu0
          %640 = vmatprep.mubr.f32.mxu0 0.0
          %641 = vmatmul.mubr.f32.gmra.mrb[0].mxu0 %v561
          %v642 = vpop.f32.mrb[0].mxu0
          %v643 = vadd.f32 %v449, %v642
          %v644 = vpop.f32.mrb[0].mxu0
          %645 = vmatprep.mubr.f32.mxu0 0.0
          %646 = vmatmul.mubr.f32.gmra.mrb[0].mxu0 %v564
          %v647 = vpop.f32.mrb[0].mxu0
          %v648 = vadd.f32 %v454, %v647
          %v649 = vpop.f32.mrb[0].mxu0
          %650 = vdwg.mxu0
          %vm651 = vcmask 64512
          %652 = vst.msk [vmem:[#allocation2] sm:$0xff] %vm651, %v536
          %653 = vst.msk [vmem:[#allocation2 + $0x8] sm:$0xff] %vm651, %v541
          %654 = vst.msk [vmem:[#allocation3] sm:$0xff] %vm651, %v633
          %655 = vst.msk [vmem:[#allocation3 + $0x8] sm:$0xff] %vm651, %v638
          %s656 = scalar_lea.vmem [#allocation2], 16
          %657 = vst.msk [vmem:[%s656] sm:$0xff] %vm651, %v546
          %658 = vst.msk [vmem:[%s656 + $0x8] sm:$0xff] %vm651, %v551
          %s659 = scalar_lea.vmem [#allocation3], 16
          %660 = vst.msk [vmem:[%s659] sm:$0xff] %vm651, %v643
          %661 = vst.msk [vmem:[%s659 + $0x8] sm:$0xff] %vm651, %v648
        $region56: #{tpu_custom_call.1} parent=51 // pred_fallthru
          _
        %v662 = vld [vmem:[%s372] sm:$0xff]
        %v663 = vld [vmem:[%s2] sm:$0xff]
        %v664 = vld [vmem:[%s2 + $0x8] sm:$0xff]
        %v665 = vld [vmem:[%s2 + $0x10] sm:$0xff]
        %v666 = vld [vmem:[%s2 + $0x18] sm:$0xff]
        %v667 = vld [vmem:[%s3] sm:$0x1]
        %v669 = vlaneseq
        %v670 = vshrl.u32 %v669, 7
        %v671 = vsub.s32 0, %v670
        %v672 = vrot.slane %v667, %v671
        %vm674 = vcmask 261120
        %v676 = vsel %vm674, %v662, 0
        %678 = vmatprep.subr.mxu0 0.0
        %679 = vmatpush1.msra.mxu0 %v663
        %680 = vmatprep.subr.mxu0 0.0
        %681 = vmatpush1.msra.mxu0 %v664
        %682 = vmatprep.subr.mxu0 0.0
        %683 = vmatpush1.msra.mxu0 %v665
        %684 = vmatprep.subr.mxu0 0.0
        %685 = vmatpush1.msra.mxu0 %v666
        %686 = vmatprep.subr.mxu0 0.0
        %687 = vmatpush1.msra.mxu0 0.0
        %688 = vmatprep.subr.mxu0 0.0
        %689 = vmatpush1.msra.mxu0 0.0
        %690 = vmatprep.subr.mxu0 0.0
        %691 = vmatpush1.msra.mxu0 0.0
        %692 = vmatprep.subr.mxu0 0.0
        %693 = vmatpush1.msra.mxu0 0.0
        %694 = vmatprep.subr.mxu0 0.0
        %695 = vmatpush1.msra.mxu0 0.0
        %696 = vmatprep.subr.mxu0 0.0
        %697 = vmatpush1.msra.mxu0 0.0
        %698 = vmatprep.subr.mxu0 0.0
        %699 = vmatpush1.msra.mxu0 0.0
        %700 = vmatprep.subr.mxu0 0.0
        %701 = vmatpush1.msra.mxu0 0.0
        %702 = vmatprep.subr.mxu0 0.0
        %703 = vmatpush1.msra.mxu0 0.0
        %704 = vmatprep.subr.mxu0 0.0
        %705 = vmatpush1.msra.mxu0 0.0
        %706 = vmatprep.subr.mxu0 0.0
        %707 = vmatpush1.msra.mxu0 0.0
        %708 = vmatprep.subr.mxu0 0.0
        %709 = vmatpush1.msra.mxu0 0.0
        %710 = vmatprep.subr.mxu0 0.0
        %711 = vmatpush1.msra.mxu0 0.0
        %712 = vmatprep.subr.mxu0 0.0
        %713 = vmatpush1.msra.mxu0 0.0
        %714 = vmatprep.subr.mxu0 0.0
        %715 = vmatpush1.msra.mxu0 0.0
        %716 = vmatprep.subr.mxu0 0.0
        %717 = vmatpush1.msra.mxu0 0.0
        %718 = vmatprep.subr.mxu0 0.0
        %719 = vmatpush1.msra.mxu0 0.0
        %720 = vmatprep.subr.mxu0 0.0
        %721 = vmatpush1.msra.mxu0 0.0
        %722 = vmatprep.subr.mxu0 0.0
        %723 = vmatpush1.msra.mxu0 0.0
        %724 = vmatprep.subr.mxu0 0.0
        %725 = vmatpush1.msra.mxu0 0.0
        %726 = vmatprep.subr.mxu0 0.0
        %727 = vmatpush1.msra.mxu0 0.0
        %728 = vmatprep.subr.mxu0 0.0
        %729 = vmatpush1.msra.mxu0 0.0
        %730 = vmatprep.subr.mxu0 0.0
        %731 = vmatpush1.msra.mxu0 0.0
        %732 = vmatprep.subr.mxu0 0.0
        %733 = vmatpush1.msra.mxu0 0.0
        %734 = vmatprep.subr.mxu0 0.0
        %735 = vmatpush1.msra.mxu0 0.0
        %736 = vmatprep.subr.mxu0 0.0
        %737 = vmatpush1.msra.mxu0 0.0
        %738 = vmatprep.subr.mxu0 0.0
        %739 = vmatpush1.msra.mxu0 0.0
        %740 = vmatprep.subr.mxu0 0.0
        %741 = vmatpush1.msra.mxu0 0.0
        %742 = vmatprep.mubr.f32.mxu0 0.0
        %743 = vmatmul.mubr.f32.gmra.mrb[0].mxu0 %v676
        %v744 = vpop.f32.mrb[0].mxu0
        %v745 = vadd.f32 %v672, %v744
        %v746 = vpop.f32.mrb[0].mxu0
        %747 = vdwg.mxu0
        %v748 = vmul.f32 %v745, 0.25
        %750 = vrot.lane.b32.xlu0 %v748, 112
        %v751 = vpop.permute.xlu0 %750
        %v752 = vld [vmem:[#allocation2] sm:$0xff]
        %v753 = vld [vmem:[#allocation2 + $0x8] sm:$0xff]
        %v754 = vld [vmem:[#allocation2 + $0x10] sm:$0xff]
        %v755 = vld [vmem:[#allocation2 + $0x18] sm:$0xff]
        %v756 = vld [vmem:[%s380] sm:$0x1]
        %v758 = vlaneseq
        %v759 = vshrl.u32 %v758, 7
        %v760 = vsub.s32 0, %v759
        %v761 = vrot.slane %v756, %v760
        %vm763 = vcmask 130048
        %v764 = vsel %vm763, %v748, 0
        %766 = vmatprep.subr.mxu0 0.0
        %767 = vmatpush1.msra.mxu0 %v752
        %768 = vmatprep.subr.mxu0 0.0
        %769 = vmatpush1.msra.mxu0 %v753
        %770 = vmatprep.subr.mxu0 0.0
        %771 = vmatpush1.msra.mxu0 0.0
        %772 = vmatprep.subr.mxu0 0.0
        %773 = vmatpush1.msra.mxu0 0.0
        %774 = vmatprep.subr.mxu0 0.0
        %775 = vmatpush1.msra.mxu0 0.0
        %776 = vmatprep.subr.mxu0 0.0
        %777 = vmatpush1.msra.mxu0 0.0
        %778 = vmatprep.subr.mxu0 0.0
        %779 = vmatpush1.msra.mxu0 0.0
        %780 = vmatprep.subr.mxu0 0.0
        %781 = vmatpush1.msra.mxu0 0.0
        %782 = vmatprep.subr.mxu0 0.0
        %783 = vmatpush1.msra.mxu0 0.0
        %784 = vmatprep.subr.mxu0 0.0
        %785 = vmatpush1.msra.mxu0 0.0
        %786 = vmatprep.subr.mxu0 0.0
        %787 = vmatpush1.msra.mxu0 0.0
        %788 = vmatprep.subr.mxu0 0.0
        %789 = vmatpush1.msra.mxu0 0.0
        %790 = vmatprep.subr.mxu0 0.0
        %791 = vmatpush1.msra.mxu0 0.0
        %792 = vmatprep.subr.mxu0 0.0
        %793 = vmatpush1.msra.mxu0 0.0
        %794 = vmatprep.subr.mxu0 0.0
        %795 = vmatpush1.msra.mxu0 0.0
        %796 = vmatprep.subr.mxu0 0.0
        %797 = vmatpush1.msra.mxu0 0.0
        %798 = vmatprep.subr.mxu0 0.0
        %799 = vmatpush1.msra.mxu0 0.0
        %800 = vmatprep.subr.mxu0 0.0
        %801 = vmatpush1.msra.mxu0 0.0
        %802 = vmatprep.subr.mxu0 0.0
        %803 = vmatpush1.msra.mxu0 0.0
        %804 = vmatprep.subr.mxu0 0.0
        %805 = vmatpush1.msra.mxu0 0.0
        %806 = vmatprep.subr.mxu0 0.0
        %807 = vmatpush1.msra.mxu0 0.0
        %808 = vmatprep.subr.mxu0 0.0
        %809 = vmatpush1.msra.mxu0 0.0
        %810 = vmatprep.subr.mxu0 0.0
        %811 = vmatpush1.msra.mxu0 0.0
        %812 = vmatprep.subr.mxu0 0.0
        %813 = vmatpush1.msra.mxu0 0.0
        %814 = vmatprep.subr.mxu0 0.0
        %815 = vmatpush1.msra.mxu0 0.0
        %816 = vmatprep.subr.mxu0 0.0
        %817 = vmatpush1.msra.mxu0 0.0
        %818 = vmatprep.subr.mxu0 0.0
        %819 = vmatpush1.msra.mxu0 0.0
        %820 = vmatprep.subr.mxu0 0.0
        %821 = vmatpush1.msra.mxu0 0.0
        %822 = vmatprep.subr.mxu0 0.0
        %823 = vmatpush1.msra.mxu0 0.0
        %824 = vmatprep.subr.mxu0 0.0
        %825 = vmatpush1.msra.mxu0 0.0
        %826 = vmatprep.subr.mxu0 0.0
        %827 = vmatpush1.msra.mxu0 0.0
        %828 = vmatprep.subr.mxu0 0.0
        %829 = vmatpush1.msra.mxu0 0.0
        %830 = vmatprep.mubr.f32.mxu0 0.0
        %831 = vmatmul.mubr.f32.gmra.mrb[0].mxu0 %v764
        %v832 = vpop.f32.mrb[0].mxu0
        %v833 = vadd.f32 %v761, %v832
        %v834 = vpop.f32.mrb[0].mxu0
        %835 = vdwg.mxu0
        %v836 = vsel %vm763, %v751, 0
        %838 = vmatprep.subr.mxu0 0.0
        %839 = vmatpush1.msra.mxu0 %v754
        %840 = vmatprep.subr.mxu0 0.0
        %841 = vmatpush1.msra.mxu0 %v755
        %842 = vmatprep.subr.mxu0 0.0
        %843 = vmatpush1.msra.mxu0 0.0
        %844 = vmatprep.subr.mxu0 0.0
        %845 = vmatpush1.msra.mxu0 0.0
        %846 = vmatprep.subr.mxu0 0.0
        %847 = vmatpush1.msra.mxu0 0.0
        %848 = vmatprep.subr.mxu0 0.0
        %849 = vmatpush1.msra.mxu0 0.0
        %850 = vmatprep.subr.mxu0 0.0
        %851 = vmatpush1.msra.mxu0 0.0
        %852 = vmatprep.subr.mxu0 0.0
        %853 = vmatpush1.msra.mxu0 0.0
        %854 = vmatprep.subr.mxu0 0.0
        %855 = vmatpush1.msra.mxu0 0.0
        %856 = vmatprep.subr.mxu0 0.0
        %857 = vmatpush1.msra.mxu0 0.0
        %858 = vmatprep.subr.mxu0 0.0
        %859 = vmatpush1.msra.mxu0 0.0
        %860 = vmatprep.subr.mxu0 0.0
        %861 = vmatpush1.msra.mxu0 0.0
        %862 = vmatprep.subr.mxu0 0.0
        %863 = vmatpush1.msra.mxu0 0.0
        %864 = vmatprep.subr.mxu0 0.0
        %865 = vmatpush1.msra.mxu0 0.0
        %866 = vmatprep.subr.mxu0 0.0
        %867 = vmatpush1.msra.mxu0 0.0
        %868 = vmatprep.subr.mxu0 0.0
        %869 = vmatpush1.msra.mxu0 0.0
        %870 = vmatprep.subr.mxu0 0.0
        %871 = vmatpush1.msra.mxu0 0.0
        %872 = vmatprep.subr.mxu0 0.0
        %873 = vmatpush1.msra.mxu0 0.0
        %874 = vmatprep.subr.mxu0 0.0
        %875 = vmatpush1.msra.mxu0 0.0
        %876 = vmatprep.subr.mxu0 0.0
        %877 = vmatpush1.msra.mxu0 0.0
        %878 = vmatprep.subr.mxu0 0.0
        %879 = vmatpush1.msra.mxu0 0.0
        %880 = vmatprep.subr.mxu0 0.0
        %881 = vmatpush1.msra.mxu0 0.0
        %882 = vmatprep.subr.mxu0 0.0
        %883 = vmatpush1.msra.mxu0 0.0
        %884 = vmatprep.subr.mxu0 0.0
        %885 = vmatpush1.msra.mxu0 0.0
        %886 = vmatprep.subr.mxu0 0.0
        %887 = vmatpush1.msra.mxu0 0.0
        %888 = vmatprep.subr.mxu0 0.0
        %889 = vmatpush1.msra.mxu0 0.0
        %890 = vmatprep.subr.mxu0 0.0
        %891 = vmatpush1.msra.mxu0 0.0
        %892 = vmatprep.subr.mxu0 0.0
        %893 = vmatpush1.msra.mxu0 0.0
        %894 = vmatprep.subr.mxu0 0.0
        %895 = vmatpush1.msra.mxu0 0.0
        %896 = vmatprep.subr.mxu0 0.0
        %897 = vmatpush1.msra.mxu0 0.0
        %898 = vmatprep.subr.mxu0 0.0
        %899 = vmatpush1.msra.mxu0 0.0
        %900 = vmatprep.subr.mxu0 0.0
        %901 = vmatpush1.msra.mxu0 0.0
        %902 = vmatprep.mubr.f32.mxu0 0.0
        %903 = vmatmul.mubr.f32.gmra.mrb[0].mxu0 %v836
        %v904 = vpop.f32.mrb[0].mxu0
        %v905 = vadd.f32 %v761, %v904
        %v906 = vpop.f32.mrb[0].mxu0
        %907 = vdwg.mxu0
        %vm908 = vcmask 64512
        %v909 = vsel %vm908, %v833, -inf
        %910 = vmax.xlane.f32.xlu0 %v909
        %v911 = vpop.xlane.xlu0 %910
        %v912 = vsel %vm908, %v905, -inf
        %913 = vmax.xlane.f32.xlu0 %v912
        %v914 = vpop.xlane.xlu0 %913
        %v915 = vsub.f32 %v833, %v911
        %v916 = vsub.f32 %v905, %v914
        %v917 = vmul.f32 %v915, 1.442695
        %v918 = vpow.pop %v917
        %v919 = vmul.f32 %v916, 1.442695
        %v920 = vpow.pop %v919
        %v921 = vsel %vm908, %v918, 0.0
        %922 = vadd.xlane.f32.xlu0 %v921
        %v923 = vpop.xlane.xlu0 %922
        %v924 = vsel %vm908, %v920, 0.0
        %925 = vadd.xlane.f32.xlu0 %v924
        %v926 = vpop.xlane.xlu0 %925
        %v927 = vrcp.pop %v923
        %v928 = vrcp.pop %v926
        %v929 = vmul.f32 %v923, %v927
        %v930 = vmul.f32 %v926, %v928
        %v931 = vsub.f32 2.0, %v929
        %v932 = vsub.f32 2.0, %v930
        %v933 = vmul.f32 %v927, %v931
        %v934 = vmul.f32 %v928, %v932
        %v935 = vmul.f32 %v918, %v933
        %v936 = vmul.f32 %v920, %v934
        %v937 = vld [vmem:[#allocation3] sm:$0xff]
        %v938 = vld [vmem:[#allocation3 + $0x8] sm:$0xff]
        %v939 = vld [vmem:[#allocation3 + $0x10] sm:$0xff]
        %v940 = vld [vmem:[#allocation3 + $0x18] sm:$0xff]
        %v942 = vsel %vm908, %v935, 0
        %v945 = vsel %vm908, %v937, 0
        %v948 = vsel %vm908, %v938, 0
        %950 = vmatprep.subr.mxu0 0.0
        %951 = vmatpush1.xpose.msra.mxu0 %v945
        %952 = vmatprep.subr.mxu0 0.0
        %953 = vmatpush1.xpose.msra.mxu0 %v948
        %954 = vmatprep.subr.mxu0 0.0
        %955 = vmatpush1.xpose.msra.mxu0 0.0
        %956 = vmatprep.subr.mxu0 0.0
        %957 = vmatpush1.xpose.msra.mxu0 0.0
        %958 = vmatprep.subr.mxu0 0.0
        %959 = vmatpush1.xpose.msra.mxu0 0.0
        %960 = vmatprep.subr.mxu0 0.0
        %961 = vmatpush1.xpose.msra.mxu0 0.0
        %962 = vmatprep.subr.mxu0 0.0
        %963 = vmatpush1.xpose.msra.mxu0 0.0
        %964 = vmatprep.subr.mxu0 0.0
        %965 = vmatpush1.xpose.msra.mxu0 0.0
        %966 = vmatprep.subr.mxu0 0.0
        %967 = vmatpush1.xpose.msra.mxu0 0.0
        %968 = vmatprep.subr.mxu0 0.0
        %969 = vmatpush1.xpose.msra.mxu0 0.0
        %970 = vmatprep.subr.mxu0 0.0
        %971 = vmatpush1.xpose.msra.mxu0 0.0
        %972 = vmatprep.subr.mxu0 0.0
        %973 = vmatpush1.xpose.msra.mxu0 0.0
        %974 = vmatprep.subr.mxu0 0.0
        %975 = vmatpush1.xpose.msra.mxu0 0.0
        %976 = vmatprep.subr.mxu0 0.0
        %977 = vmatpush1.xpose.msra.mxu0 0.0
        %978 = vmatprep.subr.mxu0 0.0
        %979 = vmatpush1.xpose.msra.mxu0 0.0
        %980 = vmatprep.subr.mxu0 0.0
        %981 = vmatpush1.xpose.msra.mxu0 0.0
        %982 = vmatprep.subr.mxu0 0.0
        %983 = vmatpush1.xpose.msra.mxu0 0.0
        %984 = vmatprep.subr.mxu0 0.0
        %985 = vmatpush1.xpose.msra.mxu0 0.0
        %986 = vmatprep.subr.mxu0 0.0
        %987 = vmatpush1.xpose.msra.mxu0 0.0
        %988 = vmatprep.subr.mxu0 0.0
        %989 = vmatpush1.xpose.msra.mxu0 0.0
        %990 = vmatprep.subr.mxu0 0.0
        %991 = vmatpush1.xpose.msra.mxu0 0.0
        %992 = vmatprep.subr.mxu0 0.0
        %993 = vmatpush1.xpose.msra.mxu0 0.0
        %994 = vmatprep.subr.mxu0 0.0
        %995 = vmatpush1.xpose.msra.mxu0 0.0
        %996 = vmatprep.subr.mxu0 0.0
        %997 = vmatpush1.xpose.msra.mxu0 0.0
        %998 = vmatprep.subr.mxu0 0.0
        %999 = vmatpush1.xpose.msra.mxu0 0.0
        %1000 = vmatprep.subr.mxu0 0.0
        %1001 = vmatpush1.xpose.msra.mxu0 0.0
        %1002 = vmatprep.subr.mxu0 0.0
        %1003 = vmatpush1.xpose.msra.mxu0 0.0
        %1004 = vmatprep.subr.mxu0 0.0
        %1005 = vmatpush1.xpose.msra.mxu0 0.0
        %1006 = vmatprep.subr.mxu0 0.0
        %1007 = vmatpush1.xpose.msra.mxu0 0.0
        %1008 = vmatprep.subr.mxu0 0.0
        %1009 = vmatpush1.xpose.msra.mxu0 0.0
        %1010 = vmatprep.subr.mxu0 0.0
        %1011 = vmatpush1.xpose.msra.mxu0 0.0
        %1012 = vmatprep.subr.mxu0 0.0
        %1013 = vmatpush1.xpose.msra.mxu0 0.0
        %1014 = vmatprep.mubr.f32.mxu0 0.0
        %1015 = vmatmul.mubr.f32.gmra.mrb[0].mxu0 %v942
        %v1016 = vpop.f32.mrb[0].mxu0
        %v1017 = vadd.f32 0.0, %v1016
        %v1018 = vpop.f32.mrb[0].mxu0
        %1019 = vdwg.mxu0
        %v1021 = vsel %vm908, %v936, 0
        %v1024 = vsel %vm908, %v939, 0
        %v1027 = vsel %vm908, %v940, 0
        %1029 = vmatprep.subr.mxu0 0.0
        %1030 = vmatpush1.xpose.msra.mxu0 %v1024
        %1031 = vmatprep.subr.mxu0 0.0
        %1032 = vmatpush1.xpose.msra.mxu0 %v1027
        %1033 = vmatprep.subr.mxu0 0.0
        %1034 = vmatpush1.xpose.msra.mxu0 0.0
        %1035 = vmatprep.subr.mxu0 0.0
        %1036 = vmatpush1.xpose.msra.mxu0 0.0
        %1037 = vmatprep.subr.mxu0 0.0
        %1038 = vmatpush1.xpose.msra.mxu0 0.0
        %1039 = vmatprep.subr.mxu0 0.0
        %1040 = vmatpush1.xpose.msra.mxu0 0.0
        %1041 = vmatprep.subr.mxu0 0.0
        %1042 = vmatpush1.xpose.msra.mxu0 0.0
        %1043 = vmatprep.subr.mxu0 0.0
        %1044 = vmatpush1.xpose.msra.mxu0 0.0
        %1045 = vmatprep.subr.mxu0 0.0
        %1046 = vmatpush1.xpose.msra.mxu0 0.0
        %1047 = vmatprep.subr.mxu0 0.0
        %1048 = vmatpush1.xpose.msra.mxu0 0.0
        %1049 = vmatprep.subr.mxu0 0.0
        %1050 = vmatpush1.xpose.msra.mxu0 0.0
        %1051 = vmatprep.subr.mxu0 0.0
        %1052 = vmatpush1.xpose.msra.mxu0 0.0
        %1053 = vmatprep.subr.mxu0 0.0
        %1054 = vmatpush1.xpose.msra.mxu0 0.0
        %1055 = vmatprep.subr.mxu0 0.0
        %1056 = vmatpush1.xpose.msra.mxu0 0.0
        %1057 = vmatprep.subr.mxu0 0.0
        %1058 = vmatpush1.xpose.msra.mxu0 0.0
        %1059 = vmatprep.subr.mxu0 0.0
        %1060 = vmatpush1.xpose.msra.mxu0 0.0
        %1061 = vmatprep.subr.mxu0 0.0
        %1062 = vmatpush1.xpose.msra.mxu0 0.0
        %1063 = vmatprep.subr.mxu0 0.0
        %1064 = vmatpush1.xpose.msra.mxu0 0.0
        %1065 = vmatprep.subr.mxu0 0.0
        %1066 = vmatpush1.xpose.msra.mxu0 0.0
        %1067 = vmatprep.subr.mxu0 0.0
        %1068 = vmatpush1.xpose.msra.mxu0 0.0
        %1069 = vmatprep.subr.mxu0 0.0
        %1070 = vmatpush1.xpose.msra.mxu0 0.0
        %1071 = vmatprep.subr.mxu0 0.0
        %1072 = vmatpush1.xpose.msra.mxu0 0.0
        %1073 = vmatprep.subr.mxu0 0.0
        %1074 = vmatpush1.xpose.msra.mxu0 0.0
        %1075 = vmatprep.subr.mxu0 0.0
        %1076 = vmatpush1.xpose.msra.mxu0 0.0
        %1077 = vmatprep.subr.mxu0 0.0
        %1078 = vmatpush1.xpose.msra.mxu0 0.0
        %1079 = vmatprep.subr.mxu0 0.0
        %1080 = vmatpush1.xpose.msra.mxu0 0.0
        %1081 = vmatprep.subr.mxu0 0.0
        %1082 = vmatpush1.xpose.msra.mxu0 0.0
        %1083 = vmatprep.subr.mxu0 0.0
        %1084 = vmatpush1.xpose.msra.mxu0 0.0
        %1085 = vmatprep.subr.mxu0 0.0
        %1086 = vmatpush1.xpose.msra.mxu0 0.0
        %1087 = vmatprep.subr.mxu0 0.0
        %1088 = vmatpush1.xpose.msra.mxu0 0.0
        %1089 = vmatprep.subr.mxu0 0.0
        %1090 = vmatpush1.xpose.msra.mxu0 0.0
        %1091 = vmatprep.subr.mxu0 0.0
        %1092 = vmatpush1.xpose.msra.mxu0 0.0
        %1093 = vmatprep.mubr.f32.mxu0 0.0
        %1094 = vmatmul.mubr.f32.gmra.mrb[0].mxu0 %v1021
        %v1095 = vpop.f32.mrb[0].mxu0
        %v1096 = vadd.f32 0.0, %v1095
        %v1097 = vpop.f32.mrb[0].mxu0
        %1098 = vdwg.mxu0
        %v1099 = vld [vmem:[%s387] sm:$0xff]
        %1101 = vset.pattern.permute.xlu0 0
        %1102 = vperm.xlu0 %1101, %v1099
        %v1103 = vpop.permute.xlu0 %1102
        %v1105 = vmul.f32 %v1017, %v1103
        %v1106 = vmul.f32 %v1096, %v1103
        %1107 = vst.msk [vmem:[%s365] sm:$0xff] %vm763, %v1105
        %1109 = vrot.lane.b32.xlu0 %v1106, 16
        %v1110 = vpop.permute.xlu0 %1109
        %vm1112 = vcmask 261248
        %1113 = vst.msk [vmem:[%s365] sm:$0xff] %vm1112, %v1110
        %s1114 = sand.u32 %s236, 1
        %s1115 = scalar_lea.sflag [#allocation5], %s1114
        %s1116 = sand.u32 %s236, 1
        %s1117 = smul.addr %s1116, 8
        %s1118 = scalar_lea.vmem [#allocation4], %s1117
        // Predicated region
        $region57: #{tpu_custom_call.1} parent=51 // pred_check
          %p1119 = pneg %p246
        $region58: #{tpu_custom_call.1} parent=51 // pred_check_branch
          %1121 = sbr.rel (%p1119) target = $region60
        $region59: #{tpu_custom_call.1} parent=51 // pred_region
          %s1123 = ssub.s32 128, 128
          %1124 = vsyncadd %s1115, %s1123
          %s1125 = sadd.s32 %s27, %s26
          %s1126 = smul.addr %s1125, 128
          %s1127 = scalar_lea.hbm %s8, %s1126
          %s1129 = sshll.u32 %s1118, 4
          %s1130 = int_to_ptr.vmem [resolvable:$true] %s1129
          %1132 = dma.vmem_to_hbm [thread:$0]  %s1130, 128, %s1127, %s1115
        $region60: #{tpu_custom_call.1} parent=51 // pred_fallthru
          _
      $region52: #{tpu_custom_call.1} parent=5 // pred_fallthru
        _
      %p1133 = scmp.le.s32.totalorder 2, %s17
      // Predicated region
      $region61: #{tpu_custom_call.1} parent=5 // pred_check
        %p1134 = pneg %p1133
      $region62: #{tpu_custom_call.1} parent=5 // pred_check_branch
        %1136 = sbr.rel (%p1134) target = $region64
      $region63: #{tpu_custom_call.1} parent=5 // pred_region
        %s1137 = ssub.s32 %s17, 2
        // Predicated region
        $region65: #{tpu_custom_call.1} parent=63 // pred_check
          %p1138 = pneg %p252
        $region66: #{tpu_custom_call.1} parent=63 // pred_check_branch
          %1140 = sbr.rel (%p1138) target = $region68
        $region67: #{tpu_custom_call.1} parent=63 // pred_region
          %s1141 = sand.u32 %s237, 1
          %s1142 = scalar_lea.sflag [#allocation5], %s1141
          %s1143 = sand.u32 %s237, 1
          %s1144 = smul.addr %s1143, 8
          %s1145 = scalar_lea.vmem [#allocation4], %s1144
          %1146 = dma.done %s1142, 128
        $region68: #{tpu_custom_call.1} parent=63 // pred_fallthru
          _
      $region64: #{tpu_custom_call.1} parent=5 // pred_fallthru
        _
    $region6: #{tpu_custom_call.1} parent=1 // loop_footer
      %s21 = sadd.s32 1, %s17
    $region7: #{tpu_custom_call.1} parent=1 // loop_footer_branch
      %16 = sbr.rel target = $region3
    $region8: #{tpu_custom_call.1} parent=1 // loop_exit
      _
    %1147 = vsyncpa [#allocation5], 1
    %s1148 = scalar_lea.sflag [#allocation5], 1
    %1149 = vsyncpa %s1148, 1

</llo_original>
